<compile_context>
chip_gen: v7x
topology: tpu7x:2x2x1
jax: 0.10.0
libtpu: 0.0.40
codegen_flags: <defaults>
</compile_context>

<pallas_src>
import functools

import jax
import jax.numpy as jnp
from jax import lax
from jax.experimental import pallas as pl
from jax.experimental.pallas import tpu as pltpu


def _round_up(x, m):
    return ((x + m - 1) // m) * m


# ----------------------------------------------------------------------------
# Fused kernel: expand 1x1 -> depthwise 3x3 -> project 1x1 (+ residual),
# one batch element per grid step, channels-first flat layout (C, H*W).
# ----------------------------------------------------------------------------
def _fused_block_kernel(*refs, H, W, Ho, Wo, stride, has_expand, residual,
                        pad_base):
    if has_expand:
        (x_ref, w1_ref, b1_ref, w2_ref, b2_ref, w3_ref, b3_ref,
         o_ref, hp_ref) = refs
    else:
        x_ref, w2_ref, b2_ref, w3_ref, b3_ref, o_ref, hp_ref = refs

    HW = H * W
    HoWo = Ho * Wo
    hidden = w2_ref.shape[0]

    x = x_ref[0]                                        # (Cin, H*W)

    # ---- stage 1: expand 1x1 conv (BN scale pre-folded into weights) -------
    if has_expand:
        h = jnp.dot(w1_ref[...], x, preferred_element_type=jnp.float32)
        h = jnp.clip(h + b1_ref[...].astype(jnp.float32), 0.0, 6.0)
    else:
        h = x.astype(jnp.float32)                       # hidden == Cin

    # ---- stage 2: 3x3 depthwise conv, computed at stride 1 -----------------
    # h is written into a zero-haloed flat scratch (hidden, PW) at a
    # lane-aligned offset; each tap is then a cheap static lane-shifted slice.
    # H-edge reads land in the zero halo; W-edge wraparound is masked.
    hp_ref[...] = jnp.zeros_like(hp_ref)
    hp_ref[:, pad_base:pad_base + HW] = h

    col = lax.broadcasted_iota(jnp.int32, (1, HW), 1) % W
    not_left = col != 0
    not_right = col != (W - 1)

    w2 = w2_ref[...].astype(jnp.float32)                # (hidden, 9)
    acc = jnp.zeros((hidden, HW), jnp.float32)
    for kh in range(3):
        for kw in range(3):
            off = pad_base - W - 1 + kh * W + kw
            patch = hp_ref[:, off:off + HW]             # (hidden, H*W), f32
            if kw == 0:
                patch = jnp.where(not_left, patch, 0.0)
            elif kw == 2:
                patch = jnp.where(not_right, patch, 0.0)
            acc = acc + patch * w2[:, kh * 3 + kw:kh * 3 + kw + 1]

    if stride == 1:
        dw = acc
    else:
        # stride-2 subsample as a 0/1 selection matmul (uses the idle MXU,
        # avoids 9 strided XLU relayouts per tap).
        src = lax.broadcasted_iota(jnp.int32, (HW, HoWo), 0)
        dst = lax.broadcasted_iota(jnp.int32, (HW, HoWo), 1)
        want = (dst // Wo) * (W * stride) + (dst % Wo) * stride
        sel = (src == want).astype(jnp.float32)
        dw = jnp.dot(acc, sel, preferred_element_type=jnp.float32)

    dw = jnp.clip(dw + b2_ref[...].astype(jnp.float32), 0.0, 6.0)

    # ---- stage 3: project 1x1 conv + fused residual add --------------------
    y = jnp.dot(w3_ref[...], dw.astype(w3_ref.dtype),
                preferred_element_type=jnp.float32)      # (Cout, Ho*Wo)
    y = y + b3_ref[...].astype(jnp.float32)
    if residual:
        y = y + x.astype(jnp.float32)                    # x already in VMEM
    o_ref[0] = y.astype(o_ref.dtype)


# ----------------------------------------------------------------------------
# Wrapper: NCHW in / NCHW out, exactly like the PyTorch module.
# ----------------------------------------------------------------------------
def inverted_residual_forward(x_nchw, folded, *, stride):
    assert stride in (1, 2)
    N, inp, H, W = x_nchw.shape
    hidden = folded["w2"].shape[0]
    outp = folded["w3t"].shape[0]
    has_expand = "w1t" in folded
    if not has_expand:
        assert hidden == inp
    residual = (stride == 1) and (inp == outp)

    HW = H * W
    Ho = (H + 2 - 3) // stride + 1
    Wo = (W + 2 - 3) // stride + 1
    HoWo = Ho * Wo

    pad_base = _round_up(W + 1, 128)          # lane-aligned interior store
    PW = pad_base + HW + W + 2                # zero halo on both sides

    x3 = x_nchw.reshape(N, inp, HW)           # free (contiguous NCHW) reshape

    kernel = functools.partial(
        _fused_block_kernel, H=H, W=W, Ho=Ho, Wo=Wo, stride=stride,
        has_expand=has_expand, residual=residual, pad_base=pad_base)

    in_specs = [pl.BlockSpec((1, inp, HW), lambda n: (n, 0, 0))]
    args = [x3]
    if has_expand:
        in_specs += [pl.BlockSpec((hidden, inp), lambda n: (0, 0)),
                     pl.BlockSpec((hidden, 1), lambda n: (0, 0))]
        args += [folded["w1t"], folded["b1"]]
    in_specs += [pl.BlockSpec((hidden, 9), lambda n: (0, 0)),
                 pl.BlockSpec((hidden, 1), lambda n: (0, 0)),
                 pl.BlockSpec((outp, hidden), lambda n: (0, 0)),
                 pl.BlockSpec((outp, 1), lambda n: (0, 0))]
    args += [folded["w2"], folded["b2"], folded["w3t"], folded["b3"]]

    out = pl.pallas_call(
        kernel,
        out_shape=jax.ShapeDtypeStruct((N, outp, HoWo), x_nchw.dtype),
        grid_spec=pltpu.PrefetchScalarGridSpec(
            num_scalar_prefetch=0,
            grid=(N,),
            in_specs=in_specs,
            out_specs=pl.BlockSpec((1, outp, HoWo), lambda n: (n, 0, 0)),
            scratch_shapes=[pltpu.VMEM((hidden, PW), jnp.float32)],
        ),
        compiler_params=pltpu.CompilerParams(
            dimension_semantics=("parallel",),
            vmem_limit_bytes=32 * 1024 * 1024,
        ),
    )(*args)
    return out.reshape(N, outp, Ho, Wo)


# ----------------------------------------------------------------------------
# Parameters (PyTorch layouts) + eval-mode BN folding into the conv weights.
# ----------------------------------------------------------------------------
def _fold_bn(gamma, beta, mean, var, eps=1e-5):
    scale = gamma / jnp.sqrt(var + eps)
    return scale, beta - mean * scale


def fold_params(params, dtype=jnp.float32, eps=1e-5):
    folded = {}
    if params.get("w1") is not None:
        s, b = _fold_bn(*params["bn1"], eps=eps)
        folded["w1t"] = (params["w1"][:, :, 0, 0] * s[:, None]).astype(dtype)
        folded["b1"] = b[:, None].astype(jnp.float32)
    s, b = _fold_bn(*params["bn2"], eps=eps)
    hidden = params["w2"].shape[0]
    folded["w2"] = (params["w2"].reshape(hidden, 9) * s[:, None]).astype(dtype)
    folded["b2"] = b[:, None].astype(jnp.float32)
    s, b = _fold_bn(*params["bn3"], eps=eps)
    folded["w3t"] = (params["w3"][:, :, 0, 0] * s[:, None]).astype(dtype)
    folded["b3"] = b[:, None].astype(jnp.float32)
    return folded


def init_params(key, inp, outp, expand_ratio):
    """Deterministic synthetic parameters in PyTorch layouts."""
    hidden = inp * expand_ratio
    ks = jax.random.split(key, 6)

    def bn_params(k, c):
        k1, k2, k3, k4 = jax.random.split(k, 4)
        return (1.0 + 0.1 * jax.random.normal(k1, (c,), jnp.float32),
                0.1 * jax.random.normal(k2, (c,), jnp.float32),
                0.1 * jax.random.normal(k3, (c,), jnp.float32),
                1.0 + 0.1 * jax.random.uniform(k4, (c,), jnp.float32))

    p = {}
    if expand_ratio != 1:
        p["w1"] = 0.1 * jax.random.normal(ks[0], (hidden, inp, 1, 1), jnp.float32)
        p["bn1"] = bn_params(ks[1], hidden)
    else:
        p["w1"] = None
        p["bn1"] = None
    p["w2"] = 0.1 * jax.random.normal(ks[2], (hidden, 1, 3, 3), jnp.float32)
    p["bn2"] = bn_params(ks[3], hidden)
    p["w3"] = 0.1 * jax.random.normal(ks[4], (outp, hidden, 1, 1), jnp.float32)
    p["bn3"] = bn_params(ks[5], outp)
    return p


# ----------------------------------------------------------------------------
# Independent pure-JAX reference (lax.conv + explicit BN) for verification.
# ----------------------------------------------------------------------------
def reference_forward(x_nchw, params, *, stride, eps=1e-5):
    def bn(y, bnp):
        gamma, beta, mean, var = bnp
        s = gamma / jnp.sqrt(var + eps)
        return y * s[None, :, None, None] + (beta - mean * s)[None, :, None, None]

    dn = ("NCHW", "OIHW", "NCHW")
    h = x_nchw
    if params.get("w1") is not None:
        h = lax.conv_general_dilated(h, params["w1"], (1, 1), "VALID",
                                     dimension_numbers=dn)
        h = jnp.clip(bn(h, params["bn1"]), 0.0, 6.0)
    hidden = params["w2"].shape[0]
    h = lax.conv_general_dilated(h, params["w2"], (stride, stride),
                                 [(1, 1), (1, 1)], dimension_numbers=dn,
                                 feature_group_count=hidden)
    h = jnp.clip(bn(h, params["bn2"]), 0.0, 6.0)
    h = lax.conv_general_dilated(h, params["w3"], (1, 1), "VALID",
                                 dimension_numbers=dn)
    h = bn(h, params["bn3"])
    if stride == 1 and x_nchw.shape[1] == params["w3"].shape[0]:
        h = h + x_nchw
    return h


if __name__ == "__main__":
    key = jax.random.PRNGKey(0)
    configs = [
        # (N, inp, outp, H, W, stride, expand_ratio)
        (2, 8, 8, 16, 16, 1, 4),     # residual block (stride 1, inp == outp)
        (2, 8, 16, 16, 16, 2, 4),    # down-sampling block (stride 2)
        (2, 16, 16, 16, 16, 1, 1),   # expand_ratio == 1 block (no expand conv)
    ]
    for (N, inp, outp, H, W, stride, expand) in configs:
        key, kx, kp = jax.random.split(key, 3)
        x = jax.random.normal(kx, (N, inp, H, W), jnp.float32)
        params = init_params(kp, inp, outp, expand)

        out = inverted_residual_forward(x, fold_params(params, jnp.float32),
                                        stride=stride)
        out = jax.block_until_ready(out)
        ref = jax.block_until_ready(reference_forward(x, params, stride=stride))

        assert out.shape == ref.shape, (out.shape, ref.shape)
        assert jnp.allclose(out, ref, rtol=2e-4, atol=2e-4), \
            float(jnp.max(jnp.abs(out - ref)))

    # bf16 weights/activations (halves HBM traffic on this memory-bound block);
    # matmuls still accumulate in f32 and elementwise math stays f32.
    N, inp, outp, H, W, stride, expand = configs[0]
    key, kx, kp = jax.random.split(key, 3)
    x = jax.random.normal(kx, (N, inp, H, W), jnp.float32)
    params = init_params(kp, inp, outp, expand)
    out_bf16 = inverted_residual_forward(x.astype(jnp.bfloat16),
                                         fold_params(params, jnp.bfloat16),
                                         stride=stride)
    out_bf16 = jax.block_until_ready(out_bf16).astype(jnp.float32)
    ref = reference_forward(x, params, stride=stride)
    assert jnp.allclose(out_bf16, ref, rtol=0.1, atol=0.1), \
        float(jnp.max(jnp.abs(out_bf16 - ref)))

    print("KERNEL_OK")
</pallas_src>

<mosaic_0001>
module attributes {stable_mosaic.version = 11 : i64} {
  func.func @_fused_block_kernel(%arg0: i32, %arg1: memref<1x8x256xf32, #tpu.memory_space<vmem>>, %arg2: memref<32x8xf32, #tpu.memory_space<vmem>>, %arg3: memref<32x1xf32, #tpu.memory_space<vmem>>, %arg4: memref<32x9xf32, #tpu.memory_space<vmem>>, %arg5: memref<32x1xf32, #tpu.memory_space<vmem>>, %arg6: memref<8x32xf32, #tpu.memory_space<vmem>>, %arg7: memref<8x1xf32, #tpu.memory_space<vmem>>, %arg8: memref<1x8x256xf32, #tpu.memory_space<vmem>>, %arg9: memref<32x402xf32, #tpu.memory_space<vmem>>) attributes {dimension_semantics = [#tpu.dimension_semantics<parallel>], iteration_bounds = array<i64: 2>, scalar_prefetch = 0 : i64, scratch_operands = 1 : i64, tpu.core_type = #tpu.core_type<tc>, window_params = [{transform_indices = @transform_0, window_bounds = array<i64: 1, 8, 256>}, {pipeline_mode = #tpu.pipeline_mode<synchronous>, transform_indices = @transform_1, window_bounds = array<i64: 32, 8>}, {pipeline_mode = #tpu.pipeline_mode<synchronous>, transform_indices = @transform_2, window_bounds = array<i64: 32, 1>}, {pipeline_mode = #tpu.pipeline_mode<synchronous>, transform_indices = @transform_3, window_bounds = array<i64: 32, 9>}, {pipeline_mode = #tpu.pipeline_mode<synchronous>, transform_indices = @transform_4, window_bounds = array<i64: 32, 1>}, {pipeline_mode = #tpu.pipeline_mode<synchronous>, transform_indices = @transform_5, window_bounds = array<i64: 8, 32>}, {pipeline_mode = #tpu.pipeline_mode<synchronous>, transform_indices = @transform_6, window_bounds = array<i64: 8, 1>}, {transform_indices = @transform_7, window_bounds = array<i64: 1, 8, 256>}]} {
    %c0 = arith.constant 0 : index
    %c0_0 = arith.constant 0 : index
    %c0_1 = arith.constant 0 : index
    %0 = vector.load %arg1[%c0, %c0_0, %c0_1] : memref<1x8x256xf32, #tpu.memory_space<vmem>>, vector<1x8x256xf32>
    %1 = vector.shape_cast %0 : vector<1x8x256xf32> to vector<8x256xf32>
    %c0_2 = arith.constant 0 : index
    %c0_3 = arith.constant 0 : index
    %2 = vector.load %arg2[%c0_2, %c0_3] : memref<32x8xf32, #tpu.memory_space<vmem>>, vector<32x8xf32>
    %cst = arith.constant dense<0.000000e+00> : vector<32x256xf32>
    %3 = tpu.matmul %2, %1, %cst {dimension_numbers = #tpu.dot_dimension_numbers<[1], [0], [0], [1], [0, 0, 1, 1], [], []>} : vector<32x8xf32>, vector<8x256xf32>, vector<32x256xf32> -> vector<32x256xf32>
    %c0_4 = arith.constant 0 : index
    %c0_5 = arith.constant 0 : index
    %4 = vector.load %arg3[%c0_4, %c0_5] : memref<32x1xf32, #tpu.memory_space<vmem>>, vector<32x1xf32>
    %5 = vector.broadcast %4 : vector<32x1xf32> to vector<32x256xf32>
    %6 = arith.addf %3, %5 : vector<32x256xf32>
    %cst_6 = arith.constant 0.000000e+00 : f32
    %cst_7 = arith.constant 6.000000e+00 : f32
    %7 = vector.broadcast %cst_6 : f32 to vector<32x256xf32>
    %8 = arith.maximumf %7, %6 : vector<32x256xf32>
    %9 = vector.broadcast %cst_7 : f32 to vector<32x256xf32>
    %10 = arith.minimumf %9, %8 : vector<32x256xf32>
    %cst_8 = arith.constant 0.000000e+00 : f32
    %11 = vector.broadcast %cst_8 : f32 to vector<32x402xf32>
    %c0_9 = arith.constant 0 : index
    %c0_10 = arith.constant 0 : index
    %12 = vector.load %arg9[%c0_9, %c0_10] : memref<32x402xf32, #tpu.memory_space<vmem>>, vector<32x402xf32>
    tpu.vector_store %arg9[%c0_9, %c0_10], %11 {strides = array<i32>} : memref<32x402xf32, #tpu.memory_space<vmem>>, vector<32x402xf32>,
    %c0_11 = arith.constant 0 : index
    %c128 = arith.constant 128 : index
    %13 = vector.load %arg9[%c0_11, %c128] : memref<32x402xf32, #tpu.memory_space<vmem>>, vector<32x256xf32>
    tpu.vector_store %arg9[%c0_11, %c128], %10 {strides = array<i32>} : memref<32x402xf32, #tpu.memory_space<vmem>>, vector<32x256xf32>,
    %14 = tpu.iota {dimensions = array<i32: 1>} : vector<1x256xi32>
    %c16_i32 = arith.constant 16 : i32
    %c0_i32 = arith.constant 0 : i32
    %15 = arith.cmpi eq, %c16_i32, %c0_i32 : i32
    %c1_i32 = arith.constant 1 : i32
    %16 = arith.select %15, %c1_i32, %c16_i32 : i32
    %17 = vector.broadcast %16 : i32 to vector<1x256xi32>
    %18 = arith.remsi %14, %17 : vector<1x256xi32>
    %c0_i32_12 = arith.constant 0 : i32
    %19 = vector.broadcast %c0_i32_12 : i32 to vector<1x256xi32>
    %20 = arith.cmpi ne, %18, %19 : vector<1x256xi32>
    %c0_i32_13 = arith.constant 0 : i32
    %21 = vector.broadcast %c0_i32_13 : i32 to vector<1x256xi32>
    %22 = arith.cmpi slt, %18, %21 : vector<1x256xi32>
    %c0_i32_14 = arith.constant 0 : i32
    %23 = arith.cmpi slt, %16, %c0_i32_14 : i32
    %24 = vector.broadcast %23 : i1 to vector<1x256xi1>
    %25 = vector.broadcast %24 : vector<1x256xi1> to vector<1x256xi1>
    %26 = arith.xori %22, %25 : vector<1x256xi1>
    %27 = arith.andi %26, %20 : vector<1x256xi1>
    %28 = vector.broadcast %16 : i32 to vector<1x256xi32>
    %29 = arith.addi %18, %28 : vector<1x256xi32>
    %30 = arith.select %27, %29, %18 : vector<1x256xi1>, vector<1x256xi32>
    %c0_i32_15 = arith.constant 0 : i32
    %31 = vector.broadcast %c0_i32_15 : i32 to vector<1x256xi32>
    %32 = arith.cmpi ne, %30, %31 : vector<1x256xi32>
    %c15_i32 = arith.constant 15 : i32
    %33 = vector.broadcast %c15_i32 : i32 to vector<1x256xi32>
    %34 = arith.cmpi ne, %30, %33 : vector<1x256xi32>
    %c0_16 = arith.constant 0 : index
    %c0_17 = arith.constant 0 : index
    %35 = vector.load %arg4[%c0_16, %c0_17] : memref<32x9xf32, #tpu.memory_space<vmem>>, vector<32x9xf32>
    %cst_18 = arith.constant 0.000000e+00 : f32
    %36 = vector.broadcast %cst_18 : f32 to vector<32x256xf32>
    %c0_19 = arith.constant 0 : index
    %c111 = arith.constant 111 : index
    %37 = vector.load %arg9[%c0_19, %c111] : memref<32x402xf32, #tpu.memory_space<vmem>>, vector<32x256xf32>
    %cst_20 = arith.constant 0.000000e+00 : f32
    %38 = vector.shape_cast %32 : vector<1x256xi1> to vector<1x256xi1>
    %39 = vector.broadcast %38 : vector<1x256xi1> to vector<32x256xi1>
    %40 = vector.broadcast %cst_20 : f32 to vector<32x256xf32>
    %41 = arith.select %39, %37, %40 : vector<32x256xi1>, vector<32x256xf32>
    %42 = vector.extract_strided_slice %35 {offsets = [0, 0], sizes = [32, 1], strides = [1, 1]} : vector<32x9xf32> to vector<32x1xf32>
    %43 = vector.broadcast %42 : vector<32x1xf32> to vector<32x256xf32>
    %44 = arith.mulf %41, %43 : vector<32x256xf32>
    %45 = arith.addf %36, %44 : vector<32x256xf32>
    %c0_21 = arith.constant 0 : index
    %c112 = arith.constant 112 : index
    %46 = vector.load %arg9[%c0_21, %c112] : memref<32x402xf32, #tpu.memory_space<vmem>>, vector<32x256xf32>
    %47 = vector.extract_strided_slice %35 {offsets = [0, 1], sizes = [32, 1], strides = [1, 1]} : vector<32x9xf32> to vector<32x1xf32>
    %48 = vector.broadcast %47 : vector<32x1xf32> to vector<32x256xf32>
    %49 = arith.mulf %46, %48 : vector<32x256xf32>
    %50 = arith.addf %45, %49 : vector<32x256xf32>
    %c0_22 = arith.constant 0 : index
    %c113 = arith.constant 113 : index
    %51 = vector.load %arg9[%c0_22, %c113] : memref<32x402xf32, #tpu.memory_space<vmem>>, vector<32x256xf32>
    %cst_23 = arith.constant 0.000000e+00 : f32
    %52 = vector.shape_cast %34 : vector<1x256xi1> to vector<1x256xi1>
    %53 = vector.broadcast %52 : vector<1x256xi1> to vector<32x256xi1>
    %54 = vector.broadcast %cst_23 : f32 to vector<32x256xf32>
    %55 = arith.select %53, %51, %54 : vector<32x256xi1>, vector<32x256xf32>
    %56 = vector.extract_strided_slice %35 {offsets = [0, 2], sizes = [32, 1], strides = [1, 1]} : vector<32x9xf32> to vector<32x1xf32>
    %57 = vector.broadcast %56 : vector<32x1xf32> to vector<32x256xf32>
    %58 = arith.mulf %55, %57 : vector<32x256xf32>
    %59 = arith.addf %50, %58 : vector<32x256xf32>
    %c0_24 = arith.constant 0 : index
    %c127 = arith.constant 127 : index
    %60 = vector.load %arg9[%c0_24, %c127] : memref<32x402xf32, #tpu.memory_space<vmem>>, vector<32x256xf32>
    %cst_25 = arith.constant 0.000000e+00 : f32
    %61 = vector.shape_cast %32 : vector<1x256xi1> to vector<1x256xi1>
    %62 = vector.broadcast %61 : vector<1x256xi1> to vector<32x256xi1>
    %63 = vector.broadcast %cst_25 : f32 to vector<32x256xf32>
    %64 = arith.select %62, %60, %63 : vector<32x256xi1>, vector<32x256xf32>
    %65 = vector.extract_strided_slice %35 {offsets = [0, 3], sizes = [32, 1], strides = [1, 1]} : vector<32x9xf32> to vector<32x1xf32>
    %66 = vector.broadcast %65 : vector<32x1xf32> to vector<32x256xf32>
    %67 = arith.mulf %64, %66 : vector<32x256xf32>
    %68 = arith.addf %59, %67 : vector<32x256xf32>
    %c0_26 = arith.constant 0 : index
    %c128_27 = arith.constant 128 : index
    %69 = vector.load %arg9[%c0_26, %c128_27] : memref<32x402xf32, #tpu.memory_space<vmem>>, vector<32x256xf32>
    %70 = vector.extract_strided_slice %35 {offsets = [0, 4], sizes = [32, 1], strides = [1, 1]} : vector<32x9xf32> to vector<32x1xf32>
    %71 = vector.broadcast %70 : vector<32x1xf32> to vector<32x256xf32>
    %72 = arith.mulf %69, %71 : vector<32x256xf32>
    %73 = arith.addf %68, %72 : vector<32x256xf32>
    %c0_28 = arith.constant 0 : index
    %c129 = arith.constant 129 : index
    %74 = vector.load %arg9[%c0_28, %c129] : memref<32x402xf32, #tpu.memory_space<vmem>>, vector<32x256xf32>
    %cst_29 = arith.constant 0.000000e+00 : f32
    %75 = vector.shape_cast %34 : vector<1x256xi1> to vector<1x256xi1>
    %76 = vector.broadcast %75 : vector<1x256xi1> to vector<32x256xi1>
    %77 = vector.broadcast %cst_29 : f32 to vector<32x256xf32>
    %78 = arith.select %76, %74, %77 : vector<32x256xi1>, vector<32x256xf32>
    %79 = vector.extract_strided_slice %35 {offsets = [0, 5], sizes = [32, 1], strides = [1, 1]} : vector<32x9xf32> to vector<32x1xf32>
    %80 = vector.broadcast %79 : vector<32x1xf32> to vector<32x256xf32>
    %81 = arith.mulf %78, %80 : vector<32x256xf32>
    %82 = arith.addf %73, %81 : vector<32x256xf32>
    %c0_30 = arith.constant 0 : index
    %c143 = arith.constant 143 : index
    %83 = vector.load %arg9[%c0_30, %c143] : memref<32x402xf32, #tpu.memory_space<vmem>>, vector<32x256xf32>
    %cst_31 = arith.constant 0.000000e+00 : f32
    %84 = vector.shape_cast %32 : vector<1x256xi1> to vector<1x256xi1>
    %85 = vector.broadcast %84 : vector<1x256xi1> to vector<32x256xi1>
    %86 = vector.broadcast %cst_31 : f32 to vector<32x256xf32>
    %87 = arith.select %85, %83, %86 : vector<32x256xi1>, vector<32x256xf32>
    %88 = vector.extract_strided_slice %35 {offsets = [0, 6], sizes = [32, 1], strides = [1, 1]} : vector<32x9xf32> to vector<32x1xf32>
    %89 = vector.broadcast %88 : vector<32x1xf32> to vector<32x256xf32>
    %90 = arith.mulf %87, %89 : vector<32x256xf32>
    %91 = arith.addf %82, %90 : vector<32x256xf32>
    %c0_32 = arith.constant 0 : index
    %c144 = arith.constant 144 : index
    %92 = vector.load %arg9[%c0_32, %c144] : memref<32x402xf32, #tpu.memory_space<vmem>>, vector<32x256xf32>
    %93 = vector.extract_strided_slice %35 {offsets = [0, 7], sizes = [32, 1], strides = [1, 1]} : vector<32x9xf32> to vector<32x1xf32>
    %94 = vector.broadcast %93 : vector<32x1xf32> to vector<32x256xf32>
    %95 = arith.mulf %92, %94 : vector<32x256xf32>
    %96 = arith.addf %91, %95 : vector<32x256xf32>
    %c0_33 = arith.constant 0 : index
    %c145 = arith.constant 145 : index
    %97 = vector.load %arg9[%c0_33, %c145] : memref<32x402xf32, #tpu.memory_space<vmem>>, vector<32x256xf32>
    %cst_34 = arith.constant 0.000000e+00 : f32
    %98 = vector.shape_cast %34 : vector<1x256xi1> to vector<1x256xi1>
    %99 = vector.broadcast %98 : vector<1x256xi1> to vector<32x256xi1>
    %100 = vector.broadcast %cst_34 : f32 to vector<32x256xf32>
    %101 = arith.select %99, %97, %100 : vector<32x256xi1>, vector<32x256xf32>
    %102 = vector.extract_strided_slice %35 {offsets = [0, 8], sizes = [32, 1], strides = [1, 1]} : vector<32x9xf32> to vector<32x1xf32>
    %103 = vector.broadcast %102 : vector<32x1xf32> to vector<32x256xf32>
    %104 = arith.mulf %101, %103 : vector<32x256xf32>
    %105 = arith.addf %96, %104 : vector<32x256xf32>
    %c0_35 = arith.constant 0 : index
    %c0_36 = arith.constant 0 : index
    %106 = vector.load %arg5[%c0_35, %c0_36] : memref<32x1xf32, #tpu.memory_space<vmem>>, vector<32x1xf32>
    %107 = vector.broadcast %106 : vector<32x1xf32> to vector<32x256xf32>
    %108 = arith.addf %105, %107 : vector<32x256xf32>
    %cst_37 = arith.constant 0.000000e+00 : f32
    %cst_38 = arith.constant 6.000000e+00 : f32
    %109 = vector.broadcast %cst_37 : f32 to vector<32x256xf32>
    %110 = arith.maximumf %109, %108 : vector<32x256xf32>
    %111 = vector.broadcast %cst_38 : f32 to vector<32x256xf32>
    %112 = arith.minimumf %111, %110 : vector<32x256xf32>
    %c0_39 = arith.constant 0 : index
    %c0_40 = arith.constant 0 : index
    %113 = vector.load %arg6[%c0_39, %c0_40] : memref<8x32xf32, #tpu.memory_space<vmem>>, vector<8x32xf32>
    %cst_41 = arith.constant dense<0.000000e+00> : vector<8x256xf32>
    %114 = tpu.matmul %113, %112, %cst_41 {dimension_numbers = #tpu.dot_dimension_numbers<[1], [0], [0], [1], [0, 0, 1, 1], [], []>} : vector<8x32xf32>, vector<32x256xf32>, vector<8x256xf32> -> vector<8x256xf32>
    %c0_42 = arith.constant 0 : index
    %c0_43 = arith.constant 0 : index
    %115 = vector.load %arg7[%c0_42, %c0_43] : memref<8x1xf32, #tpu.memory_space<vmem>>, vector<8x1xf32>
    %116 = vector.broadcast %115 : vector<8x1xf32> to vector<8x256xf32>
    %117 = arith.addf %114, %116 : vector<8x256xf32>
    %118 = arith.addf %117, %1 : vector<8x256xf32>
    %c0_44 = arith.constant 0 : index
    %c0_45 = arith.constant 0 : index
    %c0_46 = arith.constant 0 : index
    %119 = vector.load %arg8[%c0_44, %c0_45, %c0_46] : memref<1x8x256xf32, #tpu.memory_space<vmem>>, vector<1x8x256xf32>
    %120 = vector.shape_cast %119 : vector<1x8x256xf32> to vector<8x256xf32>
    %121 = vector.shape_cast %118 : vector<8x256xf32> to vector<1x8x256xf32>
    tpu.vector_store %arg8[%c0_44, %c0_45, %c0_46], %121 {strides = array<i32>} : memref<1x8x256xf32, #tpu.memory_space<vmem>>, vector<1x8x256xf32>,
    return
  }
  func.func @transform_0(%arg0: i32) -> (i32, i32, i32) {
    %c0_i32 = arith.constant 0 : i32
    %c0_i32_0 = arith.constant 0 : i32
    %c0_i32_1 = arith.constant 0 : i32
    return %arg0, %c0_i32, %c0_i32_0 : i32, i32, i32
  }
  func.func @transform_1(%arg0: i32) -> (i32, i32) {
    %c0_i32 = arith.constant 0 : i32
    %c0_i32_0 = arith.constant 0 : i32
    %c0_i32_1 = arith.constant 0 : i32
    return %c0_i32, %c0_i32_0 : i32, i32
  }
  func.func @transform_2(%arg0: i32) -> (i32, i32) {
    %c0_i32 = arith.constant 0 : i32
    %c0_i32_0 = arith.constant 0 : i32
    %c0_i32_1 = arith.constant 0 : i32
    return %c0_i32, %c0_i32_0 : i32, i32
  }
  func.func @transform_3(%arg0: i32) -> (i32, i32) {
    %c0_i32 = arith.constant 0 : i32
    %c0_i32_0 = arith.constant 0 : i32
    %c0_i32_1 = arith.constant 0 : i32
    return %c0_i32, %c0_i32_0 : i32, i32
  }
  func.func @transform_4(%arg0: i32) -> (i32, i32) {
    %c0_i32 = arith.constant 0 : i32
    %c0_i32_0 = arith.constant 0 : i32
    %c0_i32_1 = arith.constant 0 : i32
    return %c0_i32, %c0_i32_0 : i32, i32
  }
  func.func @transform_5(%arg0: i32) -> (i32, i32) {
    %c0_i32 = arith.constant 0 : i32
    %c0_i32_0 = arith.constant 0 : i32
    %c0_i32_1 = arith.constant 0 : i32
    return %c0_i32, %c0_i32_0 : i32, i32
  }
  func.func @transform_6(%arg0: i32) -> (i32, i32) {
    %c0_i32 = arith.constant 0 : i32
    %c0_i32_0 = arith.constant 0 : i32
    %c0_i32_1 = arith.constant 0 : i32
    return %c0_i32, %c0_i32_0 : i32, i32
  }
  func.func @transform_7(%arg0: i32) -> (i32, i32, i32) {
    %c0_i32 = arith.constant 0 : i32
    %c0_i32_0 = arith.constant 0 : i32
    %c0_i32_1 = arith.constant 0 : i32
    return %arg0, %c0_i32, %c0_i32_0 : i32, i32, i32
  }
}

</mosaic_0001>

<llo_original>
// kernel: tpu_custom_call.1
$region0: #{tpu_custom_call.1}
  #allocation0 [shape = 'u32[]', space=smem, size = 0x4, offset = 0x4, fixed_abs, tag = 'smem constant byte address 0x4 - core index']
  #allocation1 [shape = 'u32[144,128]{1,0:T(1,128)}', space=vmem, size = 0x12000, scoped, tag = 'internal scratch']
  #allocation2 [shape = 'f32[32,402]{1,0:T(8,128)}', space=vmem, size = 0x10000, scoped, tag = 'scratch operand']
  %s0 = inlined_call_operand.vmem [shape: f32[2,8,256], index: 0, kind: input, shape index: {}]
  %s1 = inlined_call_operand.vmem [shape: f32[32,8], index: 1, kind: input, shape index: {}]
  %s2 = inlined_call_operand.vmem [shape: f32[32,1], index: 2, kind: input, shape index: {}]
  %s3 = inlined_call_operand.vmem [shape: f32[32,9], index: 3, kind: input, shape index: {}]
  %s4 = inlined_call_operand.vmem [shape: f32[32,1], index: 4, kind: input, shape index: {}]
  %s5 = inlined_call_operand.vmem [shape: f32[8,32], index: 5, kind: input, shape index: {}]
  %s6 = inlined_call_operand.vmem [shape: f32[8,1], index: 6, kind: input, shape index: {}]
  %s7 = inlined_call_operand.hbm [shape: f32[2,8,256], index: 7, kind: output, shape index: {}]
  %s8 = sld [smem:[#allocation0]]
  $region61: #{tpu_custom_call.1} parent=0
    _
  %s10 = ssub.s32 1, %s8
  %s11 = scalar_select 0, %s10, %s8
  $region1: #{tpu_custom_call.1} parent=0
    #allocation3 [shape = 'u8[16384]{0}', space=vmem, size = 0x4000, scoped, tag = 'output window, operand 0']
    #allocation4 [shape = 's32[2]{0}', space=sflag, size = 0x8, scoped, tag = 'scoped memory for tpu_custom_call.1']
    %12 = vsyncpa [#allocation4], 0
    %s13 = scalar_lea.sflag [#allocation4], 1
    %14 = vsyncpa %s13, 0
    loop: start=0, step=1, limit=4
    $region2: #{tpu_custom_call.1} parent=1 // loop_pre_header
      _
    $region3: #{tpu_custom_call.1} parent=1 // loop_header
      %s16 = sphi 0, %s20
      %p17 = scmp.ge.s32.totalorder %s16, 4
      %s26 = sphi 0, %s28
      %s29 = sphi 0, %s26
      %s30 = sphi 0, %s29
      %s46 = sphi 0, %s30
      %s50 = sphi 0, %s50
      %s52 = sphi 0, %s50
      %s53 = sphi 0, %s52
      %s67 = sphi 0, %s53
      %s71 = sphi 0, %s71
      %s73 = sphi 0, %s71
      %s74 = sphi 0, %s73
      %s88 = sphi 0, %s74
      %s92 = sphi 0, %s92
      %s94 = sphi 0, %s92
      %s95 = sphi 0, %s94
      %s109 = sphi 0, %s95
      %s113 = sphi 0, %s113
      %s115 = sphi 0, %s113
      %s116 = sphi 0, %s115
      %s130 = sphi 0, %s116
      %s134 = sphi 0, %s134
      %s136 = sphi 0, %s134
      %s137 = sphi 0, %s136
      %s151 = sphi 0, %s137
      %s155 = sphi 0, %s155
      %s157 = sphi 0, %s155
      %s158 = sphi 0, %s157
      %s172 = sphi 0, %s158
      %s178 = sphi 0, %s180
      %s181 = sphi 0, %s178
      %s182 = sphi 0, %s181
      %s198 = sphi 0, %s182
    $region4: #{tpu_custom_call.1} parent=1 // loop_header_branch
      %19 = sbr.rel (%p17) target = $region8
    $region5: #{tpu_custom_call.1} parent=1 // loop_body
      %s21 = ssub.s32 %s16, 1
      %s22 = ssub.s32 %s16, 2
      %s23 = sadd.s32 %s16, 1
      %s24 = ssub.s32 %s16, %s23
      %p25 = scmp.eq.s32.totalorder %s24, 0
      %s27 = sadd.s32 %s26, 1
      %s28 = scalar_select %p25, %s26, %s27
      %p31 = pneg %p25
      %p32 = scmp.eq.s32.totalorder %s16, 1
      %p33 = por %p31, %p32
      %p34 = scmp.ne.s32.totalorder %s26, %s29
      %p35 = scmp.eq.s32.totalorder %s16, 0
      %p36 = por %p34, %p35
      %p37 = scmp.ne.s32.totalorder %s26, %s29
      %p38 = scmp.eq.s32.totalorder %s21, 1
      %p39 = por %p37, %p38
      %p40 = scmp.ne.s32.totalorder %s29, %s30
      %p41 = scmp.eq.s32.totalorder %s21, 0
      %p42 = por %p40, %p41
      %p43 = scmp.ne.s32.totalorder %s29, %s30
      %p44 = scmp.eq.s32.totalorder %s22, 1
      %p45 = por %p43, %p44
      %p47 = scmp.ne.s32.totalorder %s30, %s46
      %p48 = scmp.eq.s32.totalorder %s22, 0
      %p49 = por %p47, %p48
      %s51 = sadd.s32 %s50, 1
      %p54 = scmp.eq.s32.totalorder %s16, 1
      %p55 = scmp.ne.s32.totalorder %s50, %s52
      %p56 = scmp.eq.s32.totalorder %s16, 0
      %p57 = por %p55, %p56
      %p58 = scmp.ne.s32.totalorder %s50, %s52
      %p59 = scmp.eq.s32.totalorder %s21, 1
      %p60 = por %p58, %p59
      %p61 = scmp.ne.s32.totalorder %s52, %s53
      %p62 = scmp.eq.s32.totalorder %s21, 0
      %p63 = por %p61, %p62
      %p64 = scmp.ne.s32.totalorder %s52, %s53
      %p65 = scmp.eq.s32.totalorder %s22, 1
      %p66 = por %p64, %p65
      %p68 = scmp.ne.s32.totalorder %s53, %s67
      %p69 = scmp.eq.s32.totalorder %s22, 0
      %p70 = por %p68, %p69
      %s72 = sadd.s32 %s71, 1
      %p75 = scmp.eq.s32.totalorder %s16, 1
      %p76 = scmp.ne.s32.totalorder %s71, %s73
      %p77 = scmp.eq.s32.totalorder %s16, 0
      %p78 = por %p76, %p77
      %p79 = scmp.ne.s32.totalorder %s71, %s73
      %p80 = scmp.eq.s32.totalorder %s21, 1
      %p81 = por %p79, %p80
      %p82 = scmp.ne.s32.totalorder %s73, %s74
      %p83 = scmp.eq.s32.totalorder %s21, 0
      %p84 = por %p82, %p83
      %p85 = scmp.ne.s32.totalorder %s73, %s74
      %p86 = scmp.eq.s32.totalorder %s22, 1
      %p87 = por %p85, %p86
      %p89 = scmp.ne.s32.totalorder %s74, %s88
      %p90 = scmp.eq.s32.totalorder %s22, 0
      %p91 = por %p89, %p90
      %s93 = sadd.s32 %s92, 1
      %p96 = scmp.eq.s32.totalorder %s16, 1
      %p97 = scmp.ne.s32.totalorder %s92, %s94
      %p98 = scmp.eq.s32.totalorder %s16, 0
      %p99 = por %p97, %p98
      %p100 = scmp.ne.s32.totalorder %s92, %s94
      %p101 = scmp.eq.s32.totalorder %s21, 1
      %p102 = por %p100, %p101
      %p103 = scmp.ne.s32.totalorder %s94, %s95
      %p104 = scmp.eq.s32.totalorder %s21, 0
      %p105 = por %p103, %p104
      %p106 = scmp.ne.s32.totalorder %s94, %s95
      %p107 = scmp.eq.s32.totalorder %s22, 1
      %p108 = por %p106, %p107
      %p110 = scmp.ne.s32.totalorder %s95, %s109
      %p111 = scmp.eq.s32.totalorder %s22, 0
      %p112 = por %p110, %p111
      %s114 = sadd.s32 %s113, 1
      %p117 = scmp.eq.s32.totalorder %s16, 1
      %p118 = scmp.ne.s32.totalorder %s113, %s115
      %p119 = scmp.eq.s32.totalorder %s16, 0
      %p120 = por %p118, %p119
      %p121 = scmp.ne.s32.totalorder %s113, %s115
      %p122 = scmp.eq.s32.totalorder %s21, 1
      %p123 = por %p121, %p122
      %p124 = scmp.ne.s32.totalorder %s115, %s116
      %p125 = scmp.eq.s32.totalorder %s21, 0
      %p126 = por %p124, %p125
      %p127 = scmp.ne.s32.totalorder %s115, %s116
      %p128 = scmp.eq.s32.totalorder %s22, 1
      %p129 = por %p127, %p128
      %p131 = scmp.ne.s32.totalorder %s116, %s130
      %p132 = scmp.eq.s32.totalorder %s22, 0
      %p133 = por %p131, %p132
      %s135 = sadd.s32 %s134, 1
      %p138 = scmp.eq.s32.totalorder %s16, 1
      %p139 = scmp.ne.s32.totalorder %s134, %s136
      %p140 = scmp.eq.s32.totalorder %s16, 0
      %p141 = por %p139, %p140
      %p142 = scmp.ne.s32.totalorder %s134, %s136
      %p143 = scmp.eq.s32.totalorder %s21, 1
      %p144 = por %p142, %p143
      %p145 = scmp.ne.s32.totalorder %s136, %s137
      %p146 = scmp.eq.s32.totalorder %s21, 0
      %p147 = por %p145, %p146
      %p148 = scmp.ne.s32.totalorder %s136, %s137
      %p149 = scmp.eq.s32.totalorder %s22, 1
      %p150 = por %p148, %p149
      %p152 = scmp.ne.s32.totalorder %s137, %s151
      %p153 = scmp.eq.s32.totalorder %s22, 0
      %p154 = por %p152, %p153
      %s156 = sadd.s32 %s155, 1
      %p159 = scmp.eq.s32.totalorder %s16, 1
      %p160 = scmp.ne.s32.totalorder %s155, %s157
      %p161 = scmp.eq.s32.totalorder %s16, 0
      %p162 = por %p160, %p161
      %p163 = scmp.ne.s32.totalorder %s155, %s157
      %p164 = scmp.eq.s32.totalorder %s21, 1
      %p165 = por %p163, %p164
      %p166 = scmp.ne.s32.totalorder %s157, %s158
      %p167 = scmp.eq.s32.totalorder %s21, 0
      %p168 = por %p166, %p167
      %p169 = scmp.ne.s32.totalorder %s157, %s158
      %p170 = scmp.eq.s32.totalorder %s22, 1
      %p171 = por %p169, %p170
      %p173 = scmp.ne.s32.totalorder %s158, %s172
      %p174 = scmp.eq.s32.totalorder %s22, 0
      %p175 = por %p173, %p174
      %s176 = ssub.s32 %s16, %s23
      %p177 = scmp.eq.s32.totalorder %s176, 0
      %s179 = sadd.s32 %s178, 1
      %s180 = scalar_select %p177, %s178, %s179
      %p183 = pneg %p177
      %p184 = scmp.eq.s32.totalorder %s16, 1
      %p185 = por %p183, %p184
      %p186 = scmp.ne.s32.totalorder %s178, %s181
      %p187 = scmp.eq.s32.totalorder %s16, 0
      %p188 = por %p186, %p187
      %p189 = scmp.ne.s32.totalorder %s178, %s181
      %p190 = scmp.eq.s32.totalorder %s21, 1
      %p191 = por %p189, %p190
      %p192 = scmp.ne.s32.totalorder %s181, %s182
      %p193 = scmp.eq.s32.totalorder %s21, 0
      %p194 = por %p192, %p193
      %p195 = scmp.ne.s32.totalorder %s181, %s182
      %p196 = scmp.eq.s32.totalorder %s22, 1
      %p197 = por %p195, %p196
      %p199 = scmp.ne.s32.totalorder %s182, %s198
      %p200 = scmp.eq.s32.totalorder %s22, 0
      %p201 = por %p199, %p200
      %p202 = scmp.le.s32.totalorder 1, %s16
      %p203 = scmp.lt.s32.totalorder %s16, 3
      %p204 = pnand %p202, %p203
      %p205 = pneg %p204
      // Predicated region
      $region9: #{tpu_custom_call.1} parent=5 // pred_check
        _
      $region10: #{tpu_custom_call.1} parent=5 // pred_check_branch
        %207 = sbr.rel (%p204) target = $region12
      $region11: #{tpu_custom_call.1} parent=5 // pred_region
        %s208 = ssub.s32 %s16, 1
        // Predicated region
        $region13: #{tpu_custom_call.1} parent=11 // pred_check
          %p209 = pneg %p63
        $region14: #{tpu_custom_call.1} parent=11 // pred_check_branch
          %211 = sbr.rel (%p209) target = $region16
        $region15: #{tpu_custom_call.1} parent=11 // pred_region
          _
        $region16: #{tpu_custom_call.1} parent=11 // pred_fallthru
          _
        // Predicated region
        $region17: #{tpu_custom_call.1} parent=11 // pred_check
          %p212 = pneg %p84
        $region18: #{tpu_custom_call.1} parent=11 // pred_check_branch
          %214 = sbr.rel (%p212) target = $region20
        $region19: #{tpu_custom_call.1} parent=11 // pred_region
          _
        $region20: #{tpu_custom_call.1} parent=11 // pred_fallthru
          _
        // Predicated region
        $region21: #{tpu_custom_call.1} parent=11 // pred_check
          %p215 = pneg %p105
        $region22: #{tpu_custom_call.1} parent=11 // pred_check_branch
          %217 = sbr.rel (%p215) target = $region24
        $region23: #{tpu_custom_call.1} parent=11 // pred_region
          _
        $region24: #{tpu_custom_call.1} parent=11 // pred_fallthru
          _
        // Predicated region
        $region25: #{tpu_custom_call.1} parent=11 // pred_check
          %p218 = pneg %p126
        $region26: #{tpu_custom_call.1} parent=11 // pred_check_branch
          %220 = sbr.rel (%p218) target = $region28
        $region27: #{tpu_custom_call.1} parent=11 // pred_region
          _
        $region28: #{tpu_custom_call.1} parent=11 // pred_fallthru
          _
        // Predicated region
        $region29: #{tpu_custom_call.1} parent=11 // pred_check
          %p221 = pneg %p147
        $region30: #{tpu_custom_call.1} parent=11 // pred_check_branch
          %223 = sbr.rel (%p221) target = $region32
        $region31: #{tpu_custom_call.1} parent=11 // pred_region
          _
        $region32: #{tpu_custom_call.1} parent=11 // pred_fallthru
          _
        // Predicated region
        $region33: #{tpu_custom_call.1} parent=11 // pred_check
          %p224 = pneg %p168
        $region34: #{tpu_custom_call.1} parent=11 // pred_check_branch
          %226 = sbr.rel (%p224) target = $region36
        $region35: #{tpu_custom_call.1} parent=11 // pred_region
          _
        $region36: #{tpu_custom_call.1} parent=11 // pred_fallthru
          _
      $region12: #{tpu_custom_call.1} parent=5 // pred_fallthru
        _
      %p227 = scmp.lt.s32.totalorder %s16, 2
      // Predicated region
      $region37: #{tpu_custom_call.1} parent=5 // pred_check
        %p228 = pneg %p227
      $region38: #{tpu_custom_call.1} parent=5 // pred_check_branch
        %230 = sbr.rel (%p228) target = $region40
      $region39: #{tpu_custom_call.1} parent=5 // pred_region
        // Predicated region
        $region41: #{tpu_custom_call.1} parent=39 // pred_check
          %p231 = pneg %p36
        $region42: #{tpu_custom_call.1} parent=39 // pred_check_branch
          %233 = sbr.rel (%p231) target = $region44
        $region43: #{tpu_custom_call.1} parent=39 // pred_region
          %p234 = scmp.lt.s32.totalorder %s16, 1
          %s235 = scalar_select %p234, %s16, 1
          %s236 = smul.addr %s235, 2
          %s237 = smul.addr %s236, 8
          %s238 = scalar_lea.vmem %s0, %s237
        $region44: #{tpu_custom_call.1} parent=39 // pred_fallthru
          _
      $region40: #{tpu_custom_call.1} parent=5 // pred_fallthru
        _
      %p239 = scmp.le.s32.totalorder 1, %s16
      %p240 = scmp.lt.s32.totalorder %s16, 3
      %p241 = pnand %p239, %p240
      %p242 = pneg %p241
      // Predicated region
      $region45: #{tpu_custom_call.1} parent=5 // pred_check
        _
      $region46: #{tpu_custom_call.1} parent=5 // pred_check_branch
        %244 = sbr.rel (%p241) target = $region48
      $region47: #{tpu_custom_call.1} parent=5 // pred_region
        %s245 = ssub.s32 %s16, 1
        %p246 = scmp.lt.s32.totalorder %s21, 1
        %s247 = scalar_select %p246, %s21, 1
        %s248 = smul.addr %s247, 2
        %s249 = smul.addr %s248, 8
        %s250 = scalar_lea.vmem %s0, %s249
        %p251 = pneg %p42
        %p252 = pneg %p39
        %p253 = pneg %p63
        %p254 = pneg %p60
        %p255 = pneg %p84
        %p256 = pneg %p81
        %p257 = pneg %p105
        %p258 = pneg %p102
        %p259 = pneg %p126
        %p260 = pneg %p123
        %p261 = pneg %p147
        %p262 = pneg %p144
        %p263 = pneg %p168
        %p264 = pneg %p165
        %p265 = pneg %p194
        %p266 = pneg %p191
        %s267 = sand.u32 %s181, 1
        %s268 = scalar_lea.sflag [#allocation4], %s267
        %s269 = sand.u32 %s181, 1
        %s270 = smul.addr %s269, 16
        %s271 = scalar_lea.vmem [#allocation3], %s270
        %p272 = scmp.lt.s32.totalorder %s21, 1
        %s273 = scalar_select %p272, %s21, 1
        %s274 = smul.addr %s273, 2
        %s275 = smul.addr %s274, 8
        %s276 = scalar_lea.vmem %s0, %s275
        %v277 = vld [vmem:[%s276] sm:$0xff]
        %v278 = vld [vmem:[%s276 + $0x8] sm:$0xff]
        %v279 = vld [vmem:[%s1] sm:$0xff]
        %v280 = vld [vmem:[%s1 + $0x8] sm:$0xff]
        %v281 = vld [vmem:[%s1 + $0x10] sm:$0xff]
        %v282 = vld [vmem:[%s1 + $0x18] sm:$0xff]
        %v283 = vld [vmem:[%s2] sm:$0xff]
        %v284 = vld [vmem:[%s2 + $0x8] sm:$0xff]
        %v285 = vld [vmem:[%s2 + $0x10] sm:$0xff]
        %v286 = vld [vmem:[%s2 + $0x18] sm:$0xff]
        %288 = vset.pattern.permute.xlu0 0
        %289 = vperm.xlu0 %288, %v283
        %v290 = vpop.permute.xlu0 %289
        %293 = vset.pattern.permute.xlu0 0
        %294 = vperm.xlu0 %293, %v284
        %v295 = vpop.permute.xlu0 %294
        %298 = vset.pattern.permute.xlu0 0
        %299 = vperm.xlu0 %298, %v285
        %v300 = vpop.permute.xlu0 %299
        %303 = vset.pattern.permute.xlu0 0
        %304 = vperm.xlu0 %303, %v286
        %v305 = vpop.permute.xlu0 %304
        %vm307 = vcmask 64512
        %v309 = vsel %vm307, %v279, 0
        %v312 = vsel %vm307, %v280, 0
        %v315 = vsel %vm307, %v281, 0
        %v318 = vsel %vm307, %v282, 0
        %320 = vmatprep.subr.mxu0 %v278
        %321 = vmatpush1.msra.mxu0 %v277
        %322 = vmatprep.subr.mxu0 0.0
        %323 = vmatpush1.msra.mxu0 0.0
        %324 = vmatprep.subr.mxu0 0.0
        %325 = vmatpush1.msra.mxu0 0.0
        %326 = vmatprep.subr.mxu0 0.0
        %327 = vmatpush1.msra.mxu0 0.0
        %328 = vmatprep.subr.mxu0 0.0
        %329 = vmatpush1.msra.mxu0 0.0
        %330 = vmatprep.subr.mxu0 0.0
        %331 = vmatpush1.msra.mxu0 0.0
        %332 = vmatprep.subr.mxu0 0.0
        %333 = vmatpush1.msra.mxu0 0.0
        %334 = vmatprep.subr.mxu0 0.0
        %335 = vmatpush1.msra.mxu0 0.0
        %336 = vmatprep.subr.mxu0 0.0
        %337 = vmatpush1.msra.mxu0 0.0
        %338 = vmatprep.subr.mxu0 0.0
        %339 = vmatpush1.msra.mxu0 0.0
        %340 = vmatprep.subr.mxu0 0.0
        %341 = vmatpush1.msra.mxu0 0.0
        %342 = vmatprep.subr.mxu0 0.0
        %343 = vmatpush1.msra.mxu0 0.0
        %344 = vmatprep.subr.mxu0 0.0
        %345 = vmatpush1.msra.mxu0 0.0
        %346 = vmatprep.subr.mxu0 0.0
        %347 = vmatpush1.msra.mxu0 0.0
        %348 = vmatprep.subr.mxu0 0.0
        %349 = vmatpush1.msra.mxu0 0.0
        %350 = vmatprep.subr.mxu0 0.0
        %351 = vmatpush1.msra.mxu0 0.0
        %352 = vmatprep.subr.mxu0 0.0
        %353 = vmatpush1.msra.mxu0 0.0
        %354 = vmatprep.subr.mxu0 0.0
        %355 = vmatpush1.msra.mxu0 0.0
        %356 = vmatprep.subr.mxu0 0.0
        %357 = vmatpush1.msra.mxu0 0.0
        %358 = vmatprep.subr.mxu0 0.0
        %359 = vmatpush1.msra.mxu0 0.0
        %360 = vmatprep.subr.mxu0 0.0
        %361 = vmatpush1.msra.mxu0 0.0
        %362 = vmatprep.subr.mxu0 0.0
        %363 = vmatpush1.msra.mxu0 0.0
        %364 = vmatprep.subr.mxu0 0.0
        %365 = vmatpush1.msra.mxu0 0.0
        %366 = vmatprep.subr.mxu0 0.0
        %367 = vmatpush1.msra.mxu0 0.0
        %368 = vmatprep.subr.mxu0 0.0
        %369 = vmatpush1.msra.mxu0 0.0
        %370 = vmatprep.subr.mxu0 0.0
        %371 = vmatpush1.msra.mxu0 0.0
        %372 = vmatprep.subr.mxu0 0.0
        %373 = vmatpush1.msra.mxu0 0.0
        %374 = vmatprep.subr.mxu0 0.0
        %375 = vmatpush1.msra.mxu0 0.0
        %376 = vmatprep.subr.mxu0 0.0
        %377 = vmatpush1.msra.mxu0 0.0
        %378 = vmatprep.subr.mxu0 0.0
        %379 = vmatpush1.msra.mxu0 0.0
        %380 = vmatprep.subr.mxu0 0.0
        %381 = vmatpush1.msra.mxu0 0.0
        %382 = vmatprep.subr.mxu0 0.0
        %383 = vmatpush1.msra.mxu0 0.0
        %384 = vmatprep.mubr.f32.mxu0 0.0
        %385 = vmatmul.mubr.f32.gmra.mrb[0].mxu0 %v309
        %v386 = vpop.f32.mrb[0].mxu0
        %v387 = vadd.f32 %v290, %v386
        %v388 = vpop.f32.mrb[0].mxu0
        %v389 = vadd.f32 %v290, %v388
        %390 = vmatprep.mubr.f32.mxu0 0.0
        %391 = vmatmul.mubr.f32.gmra.mrb[0].mxu0 %v312
        %v392 = vpop.f32.mrb[0].mxu0
        %v393 = vadd.f32 %v295, %v392
        %v394 = vpop.f32.mrb[0].mxu0
        %v395 = vadd.f32 %v295, %v394
        %396 = vmatprep.mubr.f32.mxu0 0.0
        %397 = vmatmul.mubr.f32.gmra.mrb[0].mxu0 %v315
        %v398 = vpop.f32.mrb[0].mxu0
        %v399 = vadd.f32 %v300, %v398
        %v400 = vpop.f32.mrb[0].mxu0
        %v401 = vadd.f32 %v300, %v400
        %402 = vmatprep.mubr.f32.mxu0 0.0
        %403 = vmatmul.mubr.f32.gmra.mrb[0].mxu0 %v318
        %v404 = vpop.f32.mrb[0].mxu0
        %v405 = vadd.f32 %v305, %v404
        %v406 = vpop.f32.mrb[0].mxu0
        %v407 = vadd.f32 %v305, %v406
        %408 = vdwg.mxu0
        %v409 = vmax.f32 %v387, 0.0
        %v410 = vmax.f32 %v389, 0.0
        %v411 = vmax.f32 %v393, 0.0
        %v412 = vmax.f32 %v395, 0.0
        %v413 = vmax.f32 %v399, 0.0
        %v414 = vmax.f32 %v401, 0.0
        %v415 = vmax.f32 %v405, 0.0
        %v416 = vmax.f32 %v407, 0.0
        %v417 = vmin.f32 %v409, 6.0
        %v418 = vmin.f32 %v410, 6.0
        %v419 = vmin.f32 %v411, 6.0
        %v420 = vmin.f32 %v412, 6.0
        %v421 = vmin.f32 %v413, 6.0
        %v422 = vmin.f32 %v414, 6.0
        %v423 = vmin.f32 %v415, 6.0
        %v424 = vmin.f32 %v416, 6.0
        %425 = vst [vmem:[#allocation2] sm:$0xff] 0.0
        %426 = vst [vmem:[#allocation2 + $0x8] sm:$0xff] 0.0
        %427 = vst [vmem:[#allocation2 + $0x10] sm:$0xff] 0.0
        %vm428 = vcmask 146432
        %429 = vst.msk [vmem:[#allocation2 + $0x18] sm:$0xff] %vm428, 0.0
        %430 = vst [vmem:[#allocation2 + $0x20] sm:$0xff] 0.0
        %431 = vst [vmem:[#allocation2 + $0x28] sm:$0xff] 0.0
        %432 = vst [vmem:[#allocation2 + $0x30] sm:$0xff] 0.0
        %433 = vst.msk [vmem:[#allocation2 + $0x38] sm:$0xff] %vm428, 0.0
        %434 = vst [vmem:[#allocation2 + $0x40] sm:$0xff] 0.0
        %435 = vst [vmem:[#allocation2 + $0x48] sm:$0xff] 0.0
        %436 = vst [vmem:[#allocation2 + $0x50] sm:$0xff] 0.0
        %437 = vst.msk [vmem:[#allocation2 + $0x58] sm:$0xff] %vm428, 0.0
        %438 = vst [vmem:[#allocation2 + $0x60] sm:$0xff] 0.0
        %439 = vst [vmem:[#allocation2 + $0x68] sm:$0xff] 0.0
        %440 = vst [vmem:[#allocation2 + $0x70] sm:$0xff] 0.0
        %441 = vst.msk [vmem:[#allocation2 + $0x78] sm:$0xff] %vm428, 0.0
        %442 = vst [vmem:[#allocation2 + $0x8] sm:$0xff] %v417
        %443 = vst [vmem:[#allocation2 + $0x10] sm:$0xff] %v418
        %444 = vst [vmem:[#allocation2 + $0x28] sm:$0xff] %v419
        %445 = vst [vmem:[#allocation2 + $0x30] sm:$0xff] %v420
        %446 = vst [vmem:[#allocation2 + $0x48] sm:$0xff] %v421
        %447 = vst [vmem:[#allocation2 + $0x50] sm:$0xff] %v422
        %448 = vst [vmem:[#allocation2 + $0x68] sm:$0xff] %v423
        %449 = vst [vmem:[#allocation2 + $0x70] sm:$0xff] %v424
        %v450 = vlaneseq
        %v451 = vand.u32 %v450, 127
        %v452 = vadd.s32 %v451, 128
        %vm453 = vcmp.lt.s32.totalorder %v451, 0
        %v454 = vsub.s32 0, %v451
        %v455 = vsel %vm453, %v454, %v451
        %v456 = vshrl.u32 %v455, 4
        %v457 = vand.u32 %v455, 15
        %v458 = vsub.s32 0, %v457
        %v459 = vsel %vm453, %v458, %v457
        %vm460 = vcmp.lt.s32.totalorder %v452, 0
        %v461 = vsub.s32 0, %v452
        %v462 = vsel %vm460, %v461, %v452
        %v463 = vshrl.u32 %v462, 4
        %v464 = vand.u32 %v462, 15
        %v465 = vsub.s32 0, %v464
        %v466 = vsel %vm460, %v465, %v464
        %vm467 = vcmp.ne.s32.totalorder %v459, 0
        %vm468 = vcmp.ne.s32.totalorder %v466, 0
        %vm469 = vcmp.lt.s32.totalorder %v459, 0
        %vm470 = vcmp.lt.s32.totalorder %v466, 0
        %vm471 = vmand %vm469, %vm467
        %vm472 = vmand %vm470, %vm468
        %v473 = vadd.s32 %v459, 16
        %v474 = vadd.s32 %v466, 16
        %v475 = vsel %vm471, %v473, %v459
        %v476 = vsel %vm472, %v474, %v466
        %vm477 = vcmp.ne.s32.totalorder %v475, 0
        %vm478 = vcmp.ne.s32.totalorder %v476, 0
        %vm479 = vcmp.ne.s32.totalorder %v475, 15
        %vm480 = vcmp.ne.s32.totalorder %v476, 15
        %v481 = vld [vmem:[%s3] sm:$0xff]
        %v482 = vld [vmem:[%s3 + $0x8] sm:$0xff]
        %v483 = vld [vmem:[%s3 + $0x10] sm:$0xff]
        %v484 = vld [vmem:[%s3 + $0x18] sm:$0xff]
        %v485 = vld [vmem:[#allocation2] sm:$0xff]
        %v486 = vld [vmem:[#allocation2 + $0x8] sm:$0xff]
        %v487 = vld [vmem:[#allocation2 + $0x10] sm:$0xff]
        %v488 = vld [vmem:[#allocation2 + $0x20] sm:$0xff]
        %v489 = vld [vmem:[#allocation2 + $0x28] sm:$0xff]
        %v490 = vld [vmem:[#allocation2 + $0x30] sm:$0xff]
        %v491 = vld [vmem:[#allocation2 + $0x40] sm:$0xff]
        %v492 = vld [vmem:[#allocation2 + $0x48] sm:$0xff]
        %v493 = vld [vmem:[#allocation2 + $0x50] sm:$0xff]
        %v494 = vld [vmem:[#allocation2 + $0x60] sm:$0xff]
        %v495 = vld [vmem:[#allocation2 + $0x68] sm:$0xff]
        %v496 = vld [vmem:[#allocation2 + $0x70] sm:$0xff]
        %v497 = vsel %vm477, 1, 0
        %v498 = vsel %vm478, 1, 0
        %vm499 = vcmp.eq.s32.totalorder %v497, 1
        %vm500 = vcmp.eq.s32.totalorder %v498, 1
        %513 = vrot.lane.b32.xlu0 %v485, 17
        %v514 = vpop.permute.xlu0 %513
        %515 = vrot.lane.b32.xlu0 %v486, 17
        %v516 = vpop.permute.xlu0 %515
        %517 = vrot.lane.b32.xlu0 %v487, 17
        %v518 = vpop.permute.xlu0 %517
        %519 = vrot.lane.b32.xlu0 %v488, 17
        %v520 = vpop.permute.xlu0 %519
        %521 = vrot.lane.b32.xlu0 %v489, 17
        %v522 = vpop.permute.xlu0 %521
        %523 = vrot.lane.b32.xlu0 %v490, 17
        %v524 = vpop.permute.xlu0 %523
        %525 = vrot.lane.b32.xlu0 %v491, 17
        %v526 = vpop.permute.xlu0 %525
        %527 = vrot.lane.b32.xlu0 %v492, 17
        %v528 = vpop.permute.xlu0 %527
        %529 = vrot.lane.b32.xlu0 %v493, 17
        %v530 = vpop.permute.xlu0 %529
        %531 = vrot.lane.b32.xlu0 %v494, 17
        %v532 = vpop.permute.xlu0 %531
        %533 = vrot.lane.b32.xlu0 %v495, 17
        %v534 = vpop.permute.xlu0 %533
        %535 = vrot.lane.b32.xlu0 %v496, 17
        %v536 = vpop.permute.xlu0 %535
        %vm537 = vcmask 138240
        %v538 = vsel %vm537, %v514, %v516
        %v539 = vsel %vm537, %v516, %v518
        %v540 = vsel %vm537, %v520, %v522
        %v541 = vsel %vm537, %v522, %v524
        %v542 = vsel %vm537, %v526, %v528
        %v543 = vsel %vm537, %v528, %v530
        %v544 = vsel %vm537, %v532, %v534
        %v545 = vsel %vm537, %v534, %v536
        %v554 = vsel %vm499, %v538, 0.0
        %v555 = vsel %vm500, %v539, 0.0
        %v556 = vsel %vm499, %v540, 0.0
        %v557 = vsel %vm500, %v541, 0.0
        %v558 = vsel %vm499, %v542, 0.0
        %v559 = vsel %vm500, %v543, 0.0
        %v560 = vsel %vm499, %v544, 0.0
        %v561 = vsel %vm500, %v545, 0.0
        %563 = vset.pattern.permute.xlu0 0
        %564 = vperm.xlu0 %563, %v481
        %v565 = vpop.permute.xlu0 %564
        %568 = vset.pattern.permute.xlu0 0
        %569 = vperm.xlu0 %568, %v482
        %v570 = vpop.permute.xlu0 %569
        %573 = vset.pattern.permute.xlu0 0
        %574 = vperm.xlu0 %573, %v483
        %v575 = vpop.permute.xlu0 %574
        %578 = vset.pattern.permute.xlu0 0
        %579 = vperm.xlu0 %578, %v484
        %v580 = vpop.permute.xlu0 %579
        %v582 = vmul.f32 %v554, %v565
        %v583 = vmul.f32 %v555, %v565
        %v584 = vmul.f32 %v556, %v570
        %v585 = vmul.f32 %v557, %v570
        %v586 = vmul.f32 %v558, %v575
        %v587 = vmul.f32 %v559, %v575
        %v588 = vmul.f32 %v560, %v580
        %v589 = vmul.f32 %v561, %v580
        %v590 = vadd.f32 %v582, 0.0
        %v591 = vadd.f32 %v583, 0.0
        %v592 = vadd.f32 %v584, 0.0
        %v593 = vadd.f32 %v585, 0.0
        %v594 = vadd.f32 %v586, 0.0
        %v595 = vadd.f32 %v587, 0.0
        %v596 = vadd.f32 %v588, 0.0
        %v597 = vadd.f32 %v589, 0.0
        %598 = vset.pattern.permute.xlu0 1
        %599 = vperm.xlu0 %598, %v481
        %v600 = vpop.permute.xlu0 %599
        %602 = vset.pattern.permute.xlu0 1
        %603 = vperm.xlu0 %602, %v482
        %v604 = vpop.permute.xlu0 %603
        %606 = vset.pattern.permute.xlu0 1
        %607 = vperm.xlu0 %606, %v483
        %v608 = vpop.permute.xlu0 %607
        %610 = vset.pattern.permute.xlu0 1
        %611 = vperm.xlu0 %610, %v484
        %v612 = vpop.permute.xlu0 %611
        %v614 = vmul.f32 %v485, %v600
        %v615 = vmul.f32 %v486, %v600
        %v616 = vmul.f32 %v487, %v600
        %v617 = vmul.f32 %v488, %v604
        %v618 = vmul.f32 %v489, %v604
        %v619 = vmul.f32 %v490, %v604
        %v620 = vmul.f32 %v491, %v608
        %v621 = vmul.f32 %v492, %v608
        %v622 = vmul.f32 %v493, %v608
        %v623 = vmul.f32 %v494, %v612
        %v624 = vmul.f32 %v495, %v612
        %v625 = vmul.f32 %v496, %v612
        %638 = vrot.lane.b32.xlu0 %v614, 16
        %v639 = vpop.permute.xlu0 %638
        %640 = vrot.lane.b32.xlu0 %v615, 16
        %v641 = vpop.permute.xlu0 %640
        %642 = vrot.lane.b32.xlu0 %v616, 16
        %v643 = vpop.permute.xlu0 %642
        %644 = vrot.lane.b32.xlu0 %v617, 16
        %v645 = vpop.permute.xlu0 %644
        %646 = vrot.lane.b32.xlu0 %v618, 16
        %v647 = vpop.permute.xlu0 %646
        %648 = vrot.lane.b32.xlu0 %v619, 16
        %v649 = vpop.permute.xlu0 %648
        %650 = vrot.lane.b32.xlu0 %v620, 16
        %v651 = vpop.permute.xlu0 %650
        %652 = vrot.lane.b32.xlu0 %v621, 16
        %v653 = vpop.permute.xlu0 %652
        %654 = vrot.lane.b32.xlu0 %v622, 16
        %v655 = vpop.permute.xlu0 %654
        %656 = vrot.lane.b32.xlu0 %v623, 16
        %v657 = vpop.permute.xlu0 %656
        %658 = vrot.lane.b32.xlu0 %v624, 16
        %v659 = vpop.permute.xlu0 %658
        %660 = vrot.lane.b32.xlu0 %v625, 16
        %v661 = vpop.permute.xlu0 %660
        %vm662 = vcmask 130048
        %v663 = vsel %vm662, %v639, %v641
        %v664 = vsel %vm662, %v641, %v643
        %v665 = vsel %vm662, %v645, %v647
        %v666 = vsel %vm662, %v647, %v649
        %v667 = vsel %vm662, %v651, %v653
        %v668 = vsel %vm662, %v653, %v655
        %v669 = vsel %vm662, %v657, %v659
        %v670 = vsel %vm662, %v659, %v661
        %v679 = vadd.f32 %v590, %v663
        %v680 = vadd.f32 %v591, %v664
        %v681 = vadd.f32 %v592, %v665
        %v682 = vadd.f32 %v593, %v666
        %v683 = vadd.f32 %v594, %v667
        %v684 = vadd.f32 %v595, %v668
        %v685 = vadd.f32 %v596, %v669
        %v686 = vadd.f32 %v597, %v670
        %v687 = vsel %vm479, 1, 0
        %v688 = vsel %vm480, 1, 0
        %vm689 = vcmp.eq.s32.totalorder %v687, 1
        %vm690 = vcmp.eq.s32.totalorder %v688, 1
        %691 = vrot.lane.b32.xlu0 %v485, 15
        %v692 = vpop.permute.xlu0 %691
        %693 = vrot.lane.b32.xlu0 %v486, 15
        %v694 = vpop.permute.xlu0 %693
        %695 = vrot.lane.b32.xlu0 %v487, 15
        %v696 = vpop.permute.xlu0 %695
        %697 = vrot.lane.b32.xlu0 %v488, 15
        %v698 = vpop.permute.xlu0 %697
        %699 = vrot.lane.b32.xlu0 %v489, 15
        %v700 = vpop.permute.xlu0 %699
        %701 = vrot.lane.b32.xlu0 %v490, 15
        %v702 = vpop.permute.xlu0 %701
        %703 = vrot.lane.b32.xlu0 %v491, 15
        %v704 = vpop.permute.xlu0 %703
        %705 = vrot.lane.b32.xlu0 %v492, 15
        %v706 = vpop.permute.xlu0 %705
        %707 = vrot.lane.b32.xlu0 %v493, 15
        %v708 = vpop.permute.xlu0 %707
        %709 = vrot.lane.b32.xlu0 %v494, 15
        %v710 = vpop.permute.xlu0 %709
        %711 = vrot.lane.b32.xlu0 %v495, 15
        %v712 = vpop.permute.xlu0 %711
        %713 = vrot.lane.b32.xlu0 %v496, 15
        %v714 = vpop.permute.xlu0 %713
        %vm715 = vcmask 121856
        %v716 = vsel %vm715, %v692, %v694
        %v717 = vsel %vm715, %v694, %v696
        %v718 = vsel %vm715, %v698, %v700
        %v719 = vsel %vm715, %v700, %v702
        %v720 = vsel %vm715, %v704, %v706
        %v721 = vsel %vm715, %v706, %v708
        %v722 = vsel %vm715, %v710, %v712
        %v723 = vsel %vm715, %v712, %v714
        %v732 = vsel %vm689, %v716, 0.0
        %v733 = vsel %vm690, %v717, 0.0
        %v734 = vsel %vm689, %v718, 0.0
        %v735 = vsel %vm690, %v719, 0.0
        %v736 = vsel %vm689, %v720, 0.0
        %v737 = vsel %vm690, %v721, 0.0
        %v738 = vsel %vm689, %v722, 0.0
        %v739 = vsel %vm690, %v723, 0.0
        %740 = vset.pattern.permute.xlu0 2
        %741 = vperm.xlu0 %740, %v481
        %v742 = vpop.permute.xlu0 %741
        %744 = vset.pattern.permute.xlu0 2
        %745 = vperm.xlu0 %744, %v482
        %v746 = vpop.permute.xlu0 %745
        %748 = vset.pattern.permute.xlu0 2
        %749 = vperm.xlu0 %748, %v483
        %v750 = vpop.permute.xlu0 %749
        %752 = vset.pattern.permute.xlu0 2
        %753 = vperm.xlu0 %752, %v484
        %v754 = vpop.permute.xlu0 %753
        %v756 = vmul.f32 %v732, %v742
        %v757 = vmul.f32 %v733, %v742
        %v758 = vmul.f32 %v734, %v746
        %v759 = vmul.f32 %v735, %v746
        %v760 = vmul.f32 %v736, %v750
        %v761 = vmul.f32 %v737, %v750
        %v762 = vmul.f32 %v738, %v754
        %v763 = vmul.f32 %v739, %v754
        %v764 = vadd.f32 %v679, %v756
        %v765 = vadd.f32 %v680, %v757
        %v766 = vadd.f32 %v681, %v758
        %v767 = vadd.f32 %v682, %v759
        %v768 = vadd.f32 %v683, %v760
        %v769 = vadd.f32 %v684, %v761
        %v770 = vadd.f32 %v685, %v762
        %v771 = vadd.f32 %v686, %v763
        %772 = vrot.lane.b32.xlu0 %v485, 1
        %v773 = vpop.permute.xlu0 %772
        %774 = vrot.lane.b32.xlu0 %v486, 1
        %v775 = vpop.permute.xlu0 %774
        %776 = vrot.lane.b32.xlu0 %v487, 1
        %v777 = vpop.permute.xlu0 %776
        %778 = vrot.lane.b32.xlu0 %v488, 1
        %v779 = vpop.permute.xlu0 %778
        %780 = vrot.lane.b32.xlu0 %v489, 1
        %v781 = vpop.permute.xlu0 %780
        %782 = vrot.lane.b32.xlu0 %v490, 1
        %v783 = vpop.permute.xlu0 %782
        %784 = vrot.lane.b32.xlu0 %v491, 1
        %v785 = vpop.permute.xlu0 %784
        %786 = vrot.lane.b32.xlu0 %v492, 1
        %v787 = vpop.permute.xlu0 %786
        %788 = vrot.lane.b32.xlu0 %v493, 1
        %v789 = vpop.permute.xlu0 %788
        %790 = vrot.lane.b32.xlu0 %v494, 1
        %v791 = vpop.permute.xlu0 %790
        %792 = vrot.lane.b32.xlu0 %v495, 1
        %v793 = vpop.permute.xlu0 %792
        %794 = vrot.lane.b32.xlu0 %v496, 1
        %v795 = vpop.permute.xlu0 %794
        %vm796 = vcmask 7168
        %v797 = vsel %vm796, %v773, %v775
        %v798 = vsel %vm796, %v775, %v777
        %v799 = vsel %vm796, %v779, %v781
        %v800 = vsel %vm796, %v781, %v783
        %v801 = vsel %vm796, %v785, %v787
        %v802 = vsel %vm796, %v787, %v789
        %v803 = vsel %vm796, %v791, %v793
        %v804 = vsel %vm796, %v793, %v795
        %v813 = vsel %vm499, %v797, 0.0
        %v814 = vsel %vm500, %v798, 0.0
        %v815 = vsel %vm499, %v799, 0.0
        %v816 = vsel %vm500, %v800, 0.0
        %v817 = vsel %vm499, %v801, 0.0
        %v818 = vsel %vm500, %v802, 0.0
        %v819 = vsel %vm499, %v803, 0.0
        %v820 = vsel %vm500, %v804, 0.0
        %821 = vset.pattern.permute.xlu0 3
        %822 = vperm.xlu0 %821, %v481
        %v823 = vpop.permute.xlu0 %822
        %825 = vset.pattern.permute.xlu0 3
        %826 = vperm.xlu0 %825, %v482
        %v827 = vpop.permute.xlu0 %826
        %829 = vset.pattern.permute.xlu0 3
        %830 = vperm.xlu0 %829, %v483
        %v831 = vpop.permute.xlu0 %830
        %833 = vset.pattern.permute.xlu0 3
        %834 = vperm.xlu0 %833, %v484
        %v835 = vpop.permute.xlu0 %834
        %v837 = vmul.f32 %v813, %v823
        %v838 = vmul.f32 %v814, %v823
        %v839 = vmul.f32 %v815, %v827
        %v840 = vmul.f32 %v816, %v827
        %v841 = vmul.f32 %v817, %v831
        %v842 = vmul.f32 %v818, %v831
        %v843 = vmul.f32 %v819, %v835
        %v844 = vmul.f32 %v820, %v835
        %v845 = vadd.f32 %v764, %v837
        %v846 = vadd.f32 %v765, %v838
        %v847 = vadd.f32 %v766, %v839
        %v848 = vadd.f32 %v767, %v840
        %v849 = vadd.f32 %v768, %v841
        %v850 = vadd.f32 %v769, %v842
        %v851 = vadd.f32 %v770, %v843
        %v852 = vadd.f32 %v771, %v844
        %853 = vset.pattern.permute.xlu0 4
        %854 = vperm.xlu0 %853, %v481
        %v855 = vpop.permute.xlu0 %854
        %857 = vset.pattern.permute.xlu0 4
        %858 = vperm.xlu0 %857, %v482
        %v859 = vpop.permute.xlu0 %858
        %861 = vset.pattern.permute.xlu0 4
        %862 = vperm.xlu0 %861, %v483
        %v863 = vpop.permute.xlu0 %862
        %865 = vset.pattern.permute.xlu0 4
        %866 = vperm.xlu0 %865, %v484
        %v867 = vpop.permute.xlu0 %866
        %v869 = vmul.f32 %v486, %v855
        %v870 = vmul.f32 %v487, %v855
        %v871 = vmul.f32 %v489, %v859
        %v872 = vmul.f32 %v490, %v859
        %v873 = vmul.f32 %v492, %v863
        %v874 = vmul.f32 %v493, %v863
        %v875 = vmul.f32 %v495, %v867
        %v876 = vmul.f32 %v496, %v867
        %v877 = vadd.f32 %v845, %v869
        %v878 = vadd.f32 %v846, %v870
        %v879 = vadd.f32 %v847, %v871
        %v880 = vadd.f32 %v848, %v872
        %v881 = vadd.f32 %v849, %v873
        %v882 = vadd.f32 %v850, %v874
        %v883 = vadd.f32 %v851, %v875
        %v884 = vadd.f32 %v852, %v876
        %v885 = vld [vmem:[#allocation2 + $0x8] sm:$0xff]
        %v886 = vld [vmem:[#allocation2 + $0x10] sm:$0xff]
        %v887 = vld [vmem:[#allocation2 + $0x18] sm:$0xff]
        %v888 = vld [vmem:[#allocation2 + $0x28] sm:$0xff]
        %v889 = vld [vmem:[#allocation2 + $0x30] sm:$0xff]
        %v890 = vld [vmem:[#allocation2 + $0x38] sm:$0xff]
        %v891 = vld [vmem:[#allocation2 + $0x48] sm:$0xff]
        %v892 = vld [vmem:[#allocation2 + $0x50] sm:$0xff]
        %v893 = vld [vmem:[#allocation2 + $0x58] sm:$0xff]
        %v894 = vld [vmem:[#allocation2 + $0x68] sm:$0xff]
        %v895 = vld [vmem:[#allocation2 + $0x70] sm:$0xff]
        %v896 = vld [vmem:[#allocation2 + $0x78] sm:$0xff]
        %909 = vrot.lane.b32.xlu0 %v885, 127
        %v910 = vpop.permute.xlu0 %909
        %911 = vrot.lane.b32.xlu0 %v886, 127
        %v912 = vpop.permute.xlu0 %911
        %913 = vrot.lane.b32.xlu0 %v887, 127
        %v914 = vpop.permute.xlu0 %913
        %915 = vrot.lane.b32.xlu0 %v888, 127
        %v916 = vpop.permute.xlu0 %915
        %917 = vrot.lane.b32.xlu0 %v889, 127
        %v918 = vpop.permute.xlu0 %917
        %919 = vrot.lane.b32.xlu0 %v890, 127
        %v920 = vpop.permute.xlu0 %919
        %921 = vrot.lane.b32.xlu0 %v891, 127
        %v922 = vpop.permute.xlu0 %921
        %923 = vrot.lane.b32.xlu0 %v892, 127
        %v924 = vpop.permute.xlu0 %923
        %925 = vrot.lane.b32.xlu0 %v893, 127
        %v926 = vpop.permute.xlu0 %925
        %927 = vrot.lane.b32.xlu0 %v894, 127
        %v928 = vpop.permute.xlu0 %927
        %929 = vrot.lane.b32.xlu0 %v895, 127
        %v930 = vpop.permute.xlu0 %929
        %931 = vrot.lane.b32.xlu0 %v896, 127
        %v932 = vpop.permute.xlu0 %931
        %vm933 = vcmask 1039360
        %v934 = vsel %vm933, %v910, %v912
        %v935 = vsel %vm933, %v912, %v914
        %v936 = vsel %vm933, %v916, %v918
        %v937 = vsel %vm933, %v918, %v920
        %v938 = vsel %vm933, %v922, %v924
        %v939 = vsel %vm933, %v924, %v926
        %v940 = vsel %vm933, %v928, %v930
        %v941 = vsel %vm933, %v930, %v932
        %v950 = vsel %vm689, %v934, 0.0
        %v951 = vsel %vm690, %v935, 0.0
        %v952 = vsel %vm689, %v936, 0.0
        %v953 = vsel %vm690, %v937, 0.0
        %v954 = vsel %vm689, %v938, 0.0
        %v955 = vsel %vm690, %v939, 0.0
        %v956 = vsel %vm689, %v940, 0.0
        %v957 = vsel %vm690, %v941, 0.0
        %958 = vset.pattern.permute.xlu0 5
        %959 = vperm.xlu0 %958, %v481
        %v960 = vpop.permute.xlu0 %959
        %962 = vset.pattern.permute.xlu0 5
        %963 = vperm.xlu0 %962, %v482
        %v964 = vpop.permute.xlu0 %963
        %966 = vset.pattern.permute.xlu0 5
        %967 = vperm.xlu0 %966, %v483
        %v968 = vpop.permute.xlu0 %967
        %970 = vset.pattern.permute.xlu0 5
        %971 = vperm.xlu0 %970, %v484
        %v972 = vpop.permute.xlu0 %971
        %v974 = vmul.f32 %v950, %v960
        %v975 = vmul.f32 %v951, %v960
        %v976 = vmul.f32 %v952, %v964
        %v977 = vmul.f32 %v953, %v964
        %v978 = vmul.f32 %v954, %v968
        %v979 = vmul.f32 %v955, %v968
        %v980 = vmul.f32 %v956, %v972
        %v981 = vmul.f32 %v957, %v972
        %v982 = vadd.f32 %v877, %v974
        %v983 = vadd.f32 %v878, %v975
        %v984 = vadd.f32 %v879, %v976
        %v985 = vadd.f32 %v880, %v977
        %v986 = vadd.f32 %v881, %v978
        %v987 = vadd.f32 %v882, %v979
        %v988 = vadd.f32 %v883, %v980
        %v989 = vadd.f32 %v884, %v981
        %990 = vrot.lane.b32.xlu0 %v885, 113
        %v991 = vpop.permute.xlu0 %990
        %992 = vrot.lane.b32.xlu0 %v886, 113
        %v993 = vpop.permute.xlu0 %992
        %994 = vrot.lane.b32.xlu0 %v887, 113
        %v995 = vpop.permute.xlu0 %994
        %996 = vrot.lane.b32.xlu0 %v888, 113
        %v997 = vpop.permute.xlu0 %996
        %998 = vrot.lane.b32.xlu0 %v889, 113
        %v999 = vpop.permute.xlu0 %998
        %1000 = vrot.lane.b32.xlu0 %v890, 113
        %v1001 = vpop.permute.xlu0 %1000
        %1002 = vrot.lane.b32.xlu0 %v891, 113
        %v1003 = vpop.permute.xlu0 %1002
        %1004 = vrot.lane.b32.xlu0 %v892, 113
        %v1005 = vpop.permute.xlu0 %1004
        %1006 = vrot.lane.b32.xlu0 %v893, 113
        %v1007 = vpop.permute.xlu0 %1006
        %1008 = vrot.lane.b32.xlu0 %v894, 113
        %v1009 = vpop.permute.xlu0 %1008
        %1010 = vrot.lane.b32.xlu0 %v895, 113
        %v1011 = vpop.permute.xlu0 %1010
        %1012 = vrot.lane.b32.xlu0 %v896, 113
        %v1013 = vpop.permute.xlu0 %1012
        %vm1014 = vcmask 924672
        %v1015 = vsel %vm1014, %v991, %v993
        %v1016 = vsel %vm1014, %v993, %v995
        %v1017 = vsel %vm1014, %v997, %v999
        %v1018 = vsel %vm1014, %v999, %v1001
        %v1019 = vsel %vm1014, %v1003, %v1005
        %v1020 = vsel %vm1014, %v1005, %v1007
        %v1021 = vsel %vm1014, %v1009, %v1011
        %v1022 = vsel %vm1014, %v1011, %v1013
        %v1031 = vsel %vm499, %v1015, 0.0
        %v1032 = vsel %vm500, %v1016, 0.0
        %v1033 = vsel %vm499, %v1017, 0.0
        %v1034 = vsel %vm500, %v1018, 0.0
        %v1035 = vsel %vm499, %v1019, 0.0
        %v1036 = vsel %vm500, %v1020, 0.0
        %v1037 = vsel %vm499, %v1021, 0.0
        %v1038 = vsel %vm500, %v1022, 0.0
        %1039 = vset.pattern.permute.xlu0 6
        %1040 = vperm.xlu0 %1039, %v481
        %v1041 = vpop.permute.xlu0 %1040
        %1043 = vset.pattern.permute.xlu0 6
        %1044 = vperm.xlu0 %1043, %v482
        %v1045 = vpop.permute.xlu0 %1044
        %1047 = vset.pattern.permute.xlu0 6
        %1048 = vperm.xlu0 %1047, %v483
        %v1049 = vpop.permute.xlu0 %1048
        %1051 = vset.pattern.permute.xlu0 6
        %1052 = vperm.xlu0 %1051, %v484
        %v1053 = vpop.permute.xlu0 %1052
        %v1055 = vmul.f32 %v1031, %v1041
        %v1056 = vmul.f32 %v1032, %v1041
        %v1057 = vmul.f32 %v1033, %v1045
        %v1058 = vmul.f32 %v1034, %v1045
        %v1059 = vmul.f32 %v1035, %v1049
        %v1060 = vmul.f32 %v1036, %v1049
        %v1061 = vmul.f32 %v1037, %v1053
        %v1062 = vmul.f32 %v1038, %v1053
        %v1063 = vadd.f32 %v982, %v1055
        %v1064 = vadd.f32 %v983, %v1056
        %v1065 = vadd.f32 %v984, %v1057
        %v1066 = vadd.f32 %v985, %v1058
        %v1067 = vadd.f32 %v986, %v1059
        %v1068 = vadd.f32 %v987, %v1060
        %v1069 = vadd.f32 %v988, %v1061
        %v1070 = vadd.f32 %v989, %v1062
        %1071 = vset.pattern.permute.xlu0 7
        %1072 = vperm.xlu0 %1071, %v481
        %v1073 = vpop.permute.xlu0 %1072
        %1075 = vset.pattern.permute.xlu0 7
        %1076 = vperm.xlu0 %1075, %v482
        %v1077 = vpop.permute.xlu0 %1076
        %1079 = vset.pattern.permute.xlu0 7
        %1080 = vperm.xlu0 %1079, %v483
        %v1081 = vpop.permute.xlu0 %1080
        %1083 = vset.pattern.permute.xlu0 7
        %1084 = vperm.xlu0 %1083, %v484
        %v1085 = vpop.permute.xlu0 %1084
        %v1087 = vmul.f32 %v885, %v1073
        %v1088 = vmul.f32 %v886, %v1073
        %v1089 = vmul.f32 %v887, %v1073
        %v1090 = vmul.f32 %v888, %v1077
        %v1091 = vmul.f32 %v889, %v1077
        %v1092 = vmul.f32 %v890, %v1077
        %v1093 = vmul.f32 %v891, %v1081
        %v1094 = vmul.f32 %v892, %v1081
        %v1095 = vmul.f32 %v893, %v1081
        %v1096 = vmul.f32 %v894, %v1085
        %v1097 = vmul.f32 %v895, %v1085
        %v1098 = vmul.f32 %v896, %v1085
        %1111 = vrot.lane.b32.xlu0 %v1087, 112
        %v1112 = vpop.permute.xlu0 %1111
        %1113 = vrot.lane.b32.xlu0 %v1088, 112
        %v1114 = vpop.permute.xlu0 %1113
        %1115 = vrot.lane.b32.xlu0 %v1089, 112
        %v1116 = vpop.permute.xlu0 %1115
        %1117 = vrot.lane.b32.xlu0 %v1090, 112
        %v1118 = vpop.permute.xlu0 %1117
        %1119 = vrot.lane.b32.xlu0 %v1091, 112
        %v1120 = vpop.permute.xlu0 %1119
        %1121 = vrot.lane.b32.xlu0 %v1092, 112
        %v1122 = vpop.permute.xlu0 %1121
        %1123 = vrot.lane.b32.xlu0 %v1093, 112
        %v1124 = vpop.permute.xlu0 %1123
        %1125 = vrot.lane.b32.xlu0 %v1094, 112
        %v1126 = vpop.permute.xlu0 %1125
        %1127 = vrot.lane.b32.xlu0 %v1095, 112
        %v1128 = vpop.permute.xlu0 %1127
        %1129 = vrot.lane.b32.xlu0 %v1096, 112
        %v1130 = vpop.permute.xlu0 %1129
        %1131 = vrot.lane.b32.xlu0 %v1097, 112
        %v1132 = vpop.permute.xlu0 %1131
        %1133 = vrot.lane.b32.xlu0 %v1098, 112
        %v1134 = vpop.permute.xlu0 %1133
        %vm1135 = vcmask 916480
        %v1136 = vsel %vm1135, %v1112, %v1114
        %v1137 = vsel %vm1135, %v1114, %v1116
        %v1138 = vsel %vm1135, %v1118, %v1120
        %v1139 = vsel %vm1135, %v1120, %v1122
        %v1140 = vsel %vm1135, %v1124, %v1126
        %v1141 = vsel %vm1135, %v1126, %v1128
        %v1142 = vsel %vm1135, %v1130, %v1132
        %v1143 = vsel %vm1135, %v1132, %v1134
        %v1152 = vadd.f32 %v1063, %v1136
        %v1153 = vadd.f32 %v1064, %v1137
        %v1154 = vadd.f32 %v1065, %v1138
        %v1155 = vadd.f32 %v1066, %v1139
        %v1156 = vadd.f32 %v1067, %v1140
        %v1157 = vadd.f32 %v1068, %v1141
        %v1158 = vadd.f32 %v1069, %v1142
        %v1159 = vadd.f32 %v1070, %v1143
        %1160 = vrot.lane.b32.xlu0 %v885, 111
        %v1161 = vpop.permute.xlu0 %1160
        %1162 = vrot.lane.b32.xlu0 %v886, 111
        %v1163 = vpop.permute.xlu0 %1162
        %1164 = vrot.lane.b32.xlu0 %v887, 111
        %v1165 = vpop.permute.xlu0 %1164
        %1166 = vrot.lane.b32.xlu0 %v888, 111
        %v1167 = vpop.permute.xlu0 %1166
        %1168 = vrot.lane.b32.xlu0 %v889, 111
        %v1169 = vpop.permute.xlu0 %1168
        %1170 = vrot.lane.b32.xlu0 %v890, 111
        %v1171 = vpop.permute.xlu0 %1170
        %1172 = vrot.lane.b32.xlu0 %v891, 111
        %v1173 = vpop.permute.xlu0 %1172
        %1174 = vrot.lane.b32.xlu0 %v892, 111
        %v1175 = vpop.permute.xlu0 %1174
        %1176 = vrot.lane.b32.xlu0 %v893, 111
        %v1177 = vpop.permute.xlu0 %1176
        %1178 = vrot.lane.b32.xlu0 %v894, 111
        %v1179 = vpop.permute.xlu0 %1178
        %1180 = vrot.lane.b32.xlu0 %v895, 111
        %v1181 = vpop.permute.xlu0 %1180
        %1182 = vrot.lane.b32.xlu0 %v896, 111
        %v1183 = vpop.permute.xlu0 %1182
        %vm1184 = vcmask 908288
        %v1185 = vsel %vm1184, %v1161, %v1163
        %v1186 = vsel %vm1184, %v1163, %v1165
        %v1187 = vsel %vm1184, %v1167, %v1169
        %v1188 = vsel %vm1184, %v1169, %v1171
        %v1189 = vsel %vm1184, %v1173, %v1175
        %v1190 = vsel %vm1184, %v1175, %v1177
        %v1191 = vsel %vm1184, %v1179, %v1181
        %v1192 = vsel %vm1184, %v1181, %v1183
        %v1201 = vsel %vm689, %v1185, 0.0
        %v1202 = vsel %vm690, %v1186, 0.0
        %v1203 = vsel %vm689, %v1187, 0.0
        %v1204 = vsel %vm690, %v1188, 0.0
        %v1205 = vsel %vm689, %v1189, 0.0
        %v1206 = vsel %vm690, %v1190, 0.0
        %v1207 = vsel %vm689, %v1191, 0.0
        %v1208 = vsel %vm690, %v1192, 0.0
        %1209 = vset.pattern.permute.xlu0 8
        %1210 = vperm.xlu0 %1209, %v481
        %v1211 = vpop.permute.xlu0 %1210
        %1213 = vset.pattern.permute.xlu0 8
        %1214 = vperm.xlu0 %1213, %v482
        %v1215 = vpop.permute.xlu0 %1214
        %1217 = vset.pattern.permute.xlu0 8
        %1218 = vperm.xlu0 %1217, %v483
        %v1219 = vpop.permute.xlu0 %1218
        %1221 = vset.pattern.permute.xlu0 8
        %1222 = vperm.xlu0 %1221, %v484
        %v1223 = vpop.permute.xlu0 %1222
        %v1225 = vmul.f32 %v1201, %v1211
        %v1226 = vmul.f32 %v1202, %v1211
        %v1227 = vmul.f32 %v1203, %v1215
        %v1228 = vmul.f32 %v1204, %v1215
        %v1229 = vmul.f32 %v1205, %v1219
        %v1230 = vmul.f32 %v1206, %v1219
        %v1231 = vmul.f32 %v1207, %v1223
        %v1232 = vmul.f32 %v1208, %v1223
        %v1233 = vadd.f32 %v1152, %v1225
        %v1234 = vadd.f32 %v1153, %v1226
        %v1235 = vadd.f32 %v1154, %v1227
        %v1236 = vadd.f32 %v1155, %v1228
        %v1237 = vadd.f32 %v1156, %v1229
        %v1238 = vadd.f32 %v1157, %v1230
        %v1239 = vadd.f32 %v1158, %v1231
        %v1240 = vadd.f32 %v1159, %v1232
        %v1241 = vld [vmem:[%s4] sm:$0xff]
        %v1242 = vld [vmem:[%s4 + $0x8] sm:$0xff]
        %v1243 = vld [vmem:[%s4 + $0x10] sm:$0xff]
        %v1244 = vld [vmem:[%s4 + $0x18] sm:$0xff]
        %1246 = vset.pattern.permute.xlu0 0
        %1247 = vperm.xlu0 %1246, %v1241
        %v1248 = vpop.permute.xlu0 %1247
        %1251 = vset.pattern.permute.xlu0 0
        %1252 = vperm.xlu0 %1251, %v1242
        %v1253 = vpop.permute.xlu0 %1252
        %1256 = vset.pattern.permute.xlu0 0
        %1257 = vperm.xlu0 %1256, %v1243
        %v1258 = vpop.permute.xlu0 %1257
        %1261 = vset.pattern.permute.xlu0 0
        %1262 = vperm.xlu0 %1261, %v1244
        %v1263 = vpop.permute.xlu0 %1262
        %v1265 = vadd.f32 %v1233, %v1248
        %v1266 = vadd.f32 %v1234, %v1248
        %v1267 = vadd.f32 %v1235, %v1253
        %v1268 = vadd.f32 %v1236, %v1253
        %v1269 = vadd.f32 %v1237, %v1258
        %v1270 = vadd.f32 %v1238, %v1258
        %v1271 = vadd.f32 %v1239, %v1263
        %v1272 = vadd.f32 %v1240, %v1263
        %v1273 = vmax.f32 %v1265, 0.0
        %v1274 = vmax.f32 %v1266, 0.0
        %v1275 = vmax.f32 %v1267, 0.0
        %v1276 = vmax.f32 %v1268, 0.0
        %v1277 = vmax.f32 %v1269, 0.0
        %v1278 = vmax.f32 %v1270, 0.0
        %v1279 = vmax.f32 %v1271, 0.0
        %v1280 = vmax.f32 %v1272, 0.0
        %v1281 = vmin.f32 %v1273, 6.0
        %v1282 = vmin.f32 %v1274, 6.0
        %v1283 = vmin.f32 %v1275, 6.0
        %v1284 = vmin.f32 %v1276, 6.0
        %v1285 = vmin.f32 %v1277, 6.0
        %v1286 = vmin.f32 %v1278, 6.0
        %v1287 = vmin.f32 %v1279, 6.0
        %v1288 = vmin.f32 %v1280, 6.0
        %v1289 = vld [vmem:[%s5] sm:$0xff]
        %v1290 = vld [vmem:[%s6] sm:$0xff]
        %1292 = vset.pattern.permute.xlu0 0
        %1293 = vperm.xlu0 %1292, %v1290
        %v1294 = vpop.permute.xlu0 %1293
        %vm1296 = vcmask 261120
        %v1298 = vsel %vm1296, %v1289, 0
        %1300 = vmatprep.subr.mxu0 %v1282
        %1301 = vmatpush1.msra.mxu0 %v1281
        %1302 = vmatprep.subr.mxu0 %v1284
        %1303 = vmatpush1.msra.mxu0 %v1283
        %1304 = vmatprep.subr.mxu0 %v1286
        %1305 = vmatpush1.msra.mxu0 %v1285
        %1306 = vmatprep.subr.mxu0 %v1288
        %1307 = vmatpush1.msra.mxu0 %v1287
        %1308 = vmatprep.subr.mxu0 0.0
        %1309 = vmatpush1.msra.mxu0 0.0
        %1310 = vmatprep.subr.mxu0 0.0
        %1311 = vmatpush1.msra.mxu0 0.0
        %1312 = vmatprep.subr.mxu0 0.0
        %1313 = vmatpush1.msra.mxu0 0.0
        %1314 = vmatprep.subr.mxu0 0.0
        %1315 = vmatpush1.msra.mxu0 0.0
        %1316 = vmatprep.subr.mxu0 0.0
        %1317 = vmatpush1.msra.mxu0 0.0
        %1318 = vmatprep.subr.mxu0 0.0
        %1319 = vmatpush1.msra.mxu0 0.0
        %1320 = vmatprep.subr.mxu0 0.0
        %1321 = vmatpush1.msra.mxu0 0.0
        %1322 = vmatprep.subr.mxu0 0.0
        %1323 = vmatpush1.msra.mxu0 0.0
        %1324 = vmatprep.subr.mxu0 0.0
        %1325 = vmatpush1.msra.mxu0 0.0
        %1326 = vmatprep.subr.mxu0 0.0
        %1327 = vmatpush1.msra.mxu0 0.0
        %1328 = vmatprep.subr.mxu0 0.0
        %1329 = vmatpush1.msra.mxu0 0.0
        %1330 = vmatprep.subr.mxu0 0.0
        %1331 = vmatpush1.msra.mxu0 0.0
        %1332 = vmatprep.subr.mxu0 0.0
        %1333 = vmatpush1.msra.mxu0 0.0
        %1334 = vmatprep.subr.mxu0 0.0
        %1335 = vmatpush1.msra.mxu0 0.0
        %1336 = vmatprep.subr.mxu0 0.0
        %1337 = vmatpush1.msra.mxu0 0.0
        %1338 = vmatprep.subr.mxu0 0.0
        %1339 = vmatpush1.msra.mxu0 0.0
        %1340 = vmatprep.subr.mxu0 0.0
        %1341 = vmatpush1.msra.mxu0 0.0
        %1342 = vmatprep.subr.mxu0 0.0
        %1343 = vmatpush1.msra.mxu0 0.0
        %1344 = vmatprep.subr.mxu0 0.0
        %1345 = vmatpush1.msra.mxu0 0.0
        %1346 = vmatprep.subr.mxu0 0.0
        %1347 = vmatpush1.msra.mxu0 0.0
        %1348 = vmatprep.subr.mxu0 0.0
        %1349 = vmatpush1.msra.mxu0 0.0
        %1350 = vmatprep.subr.mxu0 0.0
        %1351 = vmatpush1.msra.mxu0 0.0
        %1352 = vmatprep.subr.mxu0 0.0
        %1353 = vmatpush1.msra.mxu0 0.0
        %1354 = vmatprep.subr.mxu0 0.0
        %1355 = vmatpush1.msra.mxu0 0.0
        %1356 = vmatprep.subr.mxu0 0.0
        %1357 = vmatpush1.msra.mxu0 0.0
        %1358 = vmatprep.subr.mxu0 0.0
        %1359 = vmatpush1.msra.mxu0 0.0
        %1360 = vmatprep.subr.mxu0 0.0
        %1361 = vmatpush1.msra.mxu0 0.0
        %1362 = vmatprep.subr.mxu0 0.0
        %1363 = vmatpush1.msra.mxu0 0.0
        %1364 = vmatprep.mubr.f32.mxu0 0.0
        %1365 = vmatmul.mubr.f32.gmra.mrb[0].mxu0 %v1298
        %v1366 = vpop.f32.mrb[0].mxu0
        %v1367 = vadd.f32 %v1294, %v1366
        %v1368 = vpop.f32.mrb[0].mxu0
        %v1369 = vadd.f32 %v1294, %v1368
        %1370 = vdwg.mxu0
        %v1371 = vadd.f32 %v1367, %v277
        %v1372 = vadd.f32 %v1369, %v278
        %1373 = vst [vmem:[%s271] sm:$0xff] %v1371
        %1374 = vst [vmem:[%s271 + $0x8] sm:$0xff] %v1372
        %s1375 = sand.u32 %s181, 1
        %s1376 = scalar_lea.sflag [#allocation4], %s1375
        %s1377 = sand.u32 %s181, 1
        %s1378 = smul.addr %s1377, 16
        %s1379 = scalar_lea.vmem [#allocation3], %s1378
        // Predicated region
        $region49: #{tpu_custom_call.1} parent=47 // pred_check
          %p1380 = pneg %p191
        $region50: #{tpu_custom_call.1} parent=47 // pred_check_branch
          %1382 = sbr.rel (%p1380) target = $region52
        $region51: #{tpu_custom_call.1} parent=47 // pred_region
          %s1384 = ssub.s32 256, 256
          %1385 = vsyncadd %s1376, %s1384
          %s1386 = smul.addr %s21, 2
          %s1387 = smul.addr %s1386, 128
          %s1388 = scalar_lea.hbm %s7, %s1387
          %s1390 = sshll.u32 %s1379, 4
          %s1391 = int_to_ptr.vmem [resolvable:$true] %s1390
          %1393 = dma.vmem_to_hbm [thread:$0]  %s1391, 256, %s1388, %s1376
        $region52: #{tpu_custom_call.1} parent=47 // pred_fallthru
          _
      $region48: #{tpu_custom_call.1} parent=5 // pred_fallthru
        _
      %p1394 = scmp.le.s32.totalorder 2, %s16
      // Predicated region
      $region53: #{tpu_custom_call.1} parent=5 // pred_check
        %p1395 = pneg %p1394
      $region54: #{tpu_custom_call.1} parent=5 // pred_check_branch
        %1397 = sbr.rel (%p1395) target = $region56
      $region55: #{tpu_custom_call.1} parent=5 // pred_region
        %s1398 = ssub.s32 %s16, 2
        // Predicated region
        $region57: #{tpu_custom_call.1} parent=55 // pred_check
          %p1399 = pneg %p197
        $region58: #{tpu_custom_call.1} parent=55 // pred_check_branch
          %1401 = sbr.rel (%p1399) target = $region60
        $region59: #{tpu_custom_call.1} parent=55 // pred_region
          %s1402 = sand.u32 %s182, 1
          %s1403 = scalar_lea.sflag [#allocation4], %s1402
          %s1404 = sand.u32 %s182, 1
          %s1405 = smul.addr %s1404, 16
          %s1406 = scalar_lea.vmem [#allocation3], %s1405
          %1407 = dma.done %s1403, 256
        $region60: #{tpu_custom_call.1} parent=55 // pred_fallthru
          _
      $region56: #{tpu_custom_call.1} parent=5 // pred_fallthru
        _
    $region6: #{tpu_custom_call.1} parent=1 // loop_footer
      %s20 = sadd.s32 1, %s16
    $region7: #{tpu_custom_call.1} parent=1 // loop_footer_branch
      %15 = sbr.rel target = $region3
    $region8: #{tpu_custom_call.1} parent=1 // loop_exit
      _
    %1408 = vsyncpa [#allocation4], 1
    %s1409 = scalar_lea.sflag [#allocation4], 1
    %1410 = vsyncpa %s1409, 1

</llo_original>
